<compile_context>
chip_gen: v7x
topology: tpu7x:2x2x1
jax: 0.10.0
libtpu: 0.0.40
codegen_flags: <defaults>
</compile_context>

<pallas_src>
import functools

import jax
import jax.numpy as jnp
import numpy as np
from jax import lax
from jax.experimental import pallas as pl
from jax.experimental.pallas import tpu as pltpu


def _res_block_kernel(xc_ref, xt_ref, xb_ref,
                      w1_ref, w2_ref, w3_ref,
                      s0_ref, b0_ref, b1_ref, b2_ref,
                      o_ref, h1_ref, *, compute_dtype, im2col):
    """One (batch image, H row-tile) grid step.

    xc_ref: (TH, W, C)        core row tile of x (reused for the residual add)
    xt_ref: (1, W, C)         row just above the tile (clamped at the border)
    xb_ref: (1, W, C)         row just below the tile (clamped at the border)
    w1_ref: (C, Cmid)         1x1 conv, BN1 scale folded in, compute_dtype
    w2_ref: (9*Cmid, Cmid)    3x3 conv (rows ordered ky,kx,cin), BN2 scale folded
    w3_ref: (Cmid, Cout)      1x1 conv, compute_dtype
    s0/b0:  (1, C)            eval-mode BN0 scale/bias (not foldable: ReLU precedes conv1)
    b1/b2:  (1, Cmid)         folded BN1/BN2 bias (scales live in w1/w2)
    o_ref:  (TH, W, Cout)
    h1_ref: (TH+2, W+2, Cmid) VMEM scratch (compute_dtype): post-BN1+ReLU activations
                              with the 3x3 conv's zero padding baked into the borders.
    """
    TH, W, C = xc_ref.shape
    Cmid = w1_ref.shape[1]
    Cout = w3_ref.shape[1]
    f32 = jnp.float32
    cdt = compute_dtype

    r = pl.program_id(1)
    nr = pl.num_programs(1)

    s0 = s0_ref[...]
    b0 = b0_ref[...]
    b1 = b1_ref[...]
    w1 = w1_ref[...]

    # ---- BN0 + ReLU + conv1x1 (BN1 scale folded) + bias + ReLU: core tile ----
    xc = xc_ref[...].astype(f32)                                  # (TH, W, C)
    a0c = jnp.maximum(xc * s0 + b0, 0.0)
    h1c = jnp.dot(a0c.reshape(TH * W, C).astype(cdt), w1,
                  preferred_element_type=f32)
    h1c = jnp.maximum(h1c + b1, 0.0)
    h1_ref[1:TH + 1, 1:W + 1, :] = h1c.reshape(TH, W, Cmid).astype(cdt)

    # ---- same path for the two halo rows (tiny M=2*W matmul). Halo rows that
    #      fall outside the image are the 3x3 conv's zero padding in H. ----------
    xh = jnp.concatenate([xt_ref[...], xb_ref[...]], axis=0).astype(f32)
    a0h = jnp.maximum(xh * s0 + b0, 0.0)
    h1h = jnp.dot(a0h.reshape(2 * W, C).astype(cdt), w1,
                  preferred_element_type=f32)
    h1h = jnp.maximum(h1h + b1, 0.0).reshape(2, W, Cmid)
    top_keep = jnp.where(r > 0, 1.0, 0.0)
    bot_keep = jnp.where(r < nr - 1, 1.0, 0.0)
    h1_ref[0:1, 1:W + 1, :] = (h1h[0:1] * top_keep).astype(cdt)
    h1_ref[TH + 1:TH + 2, 1:W + 1, :] = (h1h[1:2] * bot_keep).astype(cdt)

    # ---- zero padding columns in W (two tiny 1-column stores) -----------------
    zcol = jnp.zeros((TH + 2, 1, Cmid), cdt)
    h1_ref[:, 0:1, :] = zcol
    h1_ref[:, W + 1:W + 2, :] = zcol

    # ---- 3x3 conv (Cmid -> Cmid, BN2 scale folded into w2) --------------------
    if im2col:
        # Small Cmid: build (TH*W, 9*Cmid) patches so K fills the MXU.
        taps = [h1_ref[ky:ky + TH, kx:kx + W, :]
                for ky in range(3) for kx in range(3)]
        patches = jnp.concatenate(taps, axis=-1)                  # cdt, 9*Cmid lanes
        acc = jnp.dot(patches.reshape(TH * W, 9 * Cmid), w2_ref[...],
                      preferred_element_type=f32)
    else:
        # Large Cmid: 9 accumulating matmuls on slices of the padded scratch;
        # avoids materializing the 9x-duplicated patches buffer.
        acc = jnp.zeros((TH * W, Cmid), f32)
        for ky in range(3):
            for kx in range(3):
                t = ky * 3 + kx
                tap = h1_ref[ky:ky + TH, kx:kx + W, :].reshape(TH * W, Cmid)
                acc = acc + jnp.dot(tap, w2_ref[t * Cmid:(t + 1) * Cmid, :],
                                    preferred_element_type=f32)
    h2 = jnp.maximum(acc + b2_ref[...], 0.0).astype(cdt)          # BN2 bias + ReLU

    # ---- 1x1 conv (Cmid -> Cout) + residual add (x tile already in VMEM) ------
    res = jnp.dot(h2, w3_ref[...], preferred_element_type=f32)
    o_ref[...] = (res.reshape(TH, W, Cout) + xc).astype(o_ref.dtype)


def _estimate_vmem_bytes(TH, W, C, Cmid, Cout, cdt_bytes, im2col):
    f32b = 4
    m = TH * W
    # Double-buffered HBM<->VMEM tiles (Pallas pipeline).
    io = 2 * (m * C * f32b + 2 * W * C * f32b + m * Cout * f32b)
    # Weights / BN vectors (double-buffered by the default pipeline).
    consts = 2 * ((C * Cmid + 9 * Cmid * Cmid + Cmid * Cout) * cdt_bytes
                  + 2 * (C + Cmid) * f32b)
    scratch = (TH + 2) * (W + 2) * Cmid * cdt_bytes
    interm = (m * C * (2 * f32b + cdt_bytes)             # xc f32, a0 f32, a0 cdt
              + m * Cmid * (2 * f32b + 2 * cdt_bytes)    # h1 / acc / h2
              + m * Cout * f32b)                         # res
    if im2col:
        interm += 2 * m * 9 * Cmid * cdt_bytes           # patches (+ slack)
    else:
        interm += m * Cmid * (f32b + cdt_bytes)          # per-tap slice + acc
    return io + consts + scratch + interm


def _vmem_capacity_bytes():
    try:
        return int(pltpu.get_tpu_info().vmem_capacity_bytes)
    except Exception:
        return 64 * 2 ** 20        # conservative default: v7x per-TensorCore VMEM


def _pick_row_tile(H, W, C, Cmid, Cout, cdt_bytes, im2col, budget_bytes):
    best = 1
    for th in range(1, H + 1):
        if H % th:
            continue
        if _estimate_vmem_bytes(th, W, C, Cmid, Cout, cdt_bytes, im2col) <= budget_bytes:
            best = th
    return best


def residual_block_deep_bn_nhwc(x, w1, w2_flat, w3, s0, b0, s1, b1, s2, b2,
                                *, row_tile=None, compute_dtype=jnp.bfloat16):
    """ResidualBlockDeepBN forward, NHWC, eval-mode (folded) BatchNorm.

    x:       (N, H, W, C)
    w1:      (C, Cmid)        conv1 1x1
    w2_flat: (9*Cmid, Cmid)   conv2 3x3, rows ordered (ky, kx, cin)
    w3:      (Cmid, Cout)     conv3 1x1
    s*/b*:   per-channel folded BN scale/bias: s = gamma/sqrt(var+eps), b = beta - mean*s
    """
    N, H, W, C = x.shape
    Cmid = w1.shape[1]
    Cout = w3.shape[1]
    assert Cout == C, "residual add requires output_channels == input_channels"

    f32 = jnp.float32
    cdt_bytes = jnp.dtype(compute_dtype).itemsize
    im2col = Cmid < 128            # small Cmid: im2col fills the MXU K dim

    vmem_cap = _vmem_capacity_bytes()
    if row_tile is None:
        row_tile = _pick_row_tile(H, W, C, Cmid, Cout, cdt_bytes, im2col,
                                  budget_bytes=vmem_cap // 4)
    assert H % row_tile == 0, "row_tile must divide H"   # TODO(synk): pad ragged H
    TH = row_tile
    nr = H // TH

    # Fold post-conv BN scales into the conv weights (host-side, free):
    #   BN1(a0 @ w1) = a0 @ (w1 * s1) + b1,   BN2(p @ w2) = p @ (w2 * s2) + b2.
    w1k = (jnp.asarray(w1, f32) * jnp.asarray(s1, f32)[None, :]).astype(compute_dtype)
    w2k = (jnp.asarray(w2_flat, f32) * jnp.asarray(s2, f32)[None, :]).astype(compute_dtype)
    w3k = jnp.asarray(w3, f32).astype(compute_dtype)
    s0v, b0v, b1v, b2v = (jnp.asarray(p, f32).reshape(1, -1)
                          for p in (s0, b0, b1, b2))

    def const_spec(a):
        return pl.BlockSpec(a.shape, lambda n, r, _nd=a.ndim: (0,) * _nd)

    xc_spec = pl.BlockSpec((None, TH, W, C), lambda n, r: (n, r, 0, 0))
    # Halo rows: 1-row blocks whose block index == element row, clamped at the image
    # borders (the out-of-image rows are zero-masked inside the kernel).
    xt_spec = pl.BlockSpec((None, 1, W, C),
                           lambda n, r: (n, jnp.maximum(r * TH - 1, 0), 0, 0))
    xb_spec = pl.BlockSpec((None, 1, W, C),
                           lambda n, r: (n, jnp.minimum((r + 1) * TH, H - 1), 0, 0))
    out_spec = pl.BlockSpec((None, TH, W, Cout), lambda n, r: (n, r, 0, 0))

    est = _estimate_vmem_bytes(TH, W, C, Cmid, Cout, cdt_bytes, im2col)
    vmem_limit = int(min(int(0.75 * vmem_cap), max(32 * 2 ** 20, 3 * est)))

    kernel = functools.partial(_res_block_kernel,
                               compute_dtype=compute_dtype, im2col=im2col)
    return pl.pallas_call(
        kernel,
        out_shape=jax.ShapeDtypeStruct((N, H, W, Cout), x.dtype),
        grid=(N, nr),
        in_specs=[xc_spec, xt_spec, xb_spec,
                  const_spec(w1k), const_spec(w2k), const_spec(w3k),
                  const_spec(s0v), const_spec(b0v), const_spec(b1v), const_spec(b2v)],
        out_specs=out_spec,
        scratch_shapes=[pltpu.VMEM((TH + 2, W + 2, Cmid), compute_dtype)],
        compiler_params=pltpu.CompilerParams(
            dimension_semantics=("parallel", "parallel"),
            vmem_limit_bytes=vmem_limit),
    )(x, x, x, w1k, w2k, w3k, s0v, b0v, b1v, b2v)


def _ref_forward_nhwc(x, w1_hwio, w2_hwio, w3_hwio, s0, b0, s1, b1, s2, b2):
    """Pure-JAX (XLA conv) reference, NHWC, eval-mode folded BN."""
    dn = ('NHWC', 'HWIO', 'NHWC')
    hp = lax.Precision.HIGHEST
    a0 = jnp.maximum(x * s0 + b0, 0.0)
    z1 = lax.conv_general_dilated(a0, w1_hwio, (1, 1), 'VALID',
                                  dimension_numbers=dn, precision=hp)
    a1 = jnp.maximum(z1 * s1 + b1, 0.0)
    z2 = lax.conv_general_dilated(a1, w2_hwio, (1, 1), ((1, 1), (1, 1)),
                                  dimension_numbers=dn, precision=hp)
    a2 = jnp.maximum(z2 * s2 + b2, 0.0)
    z3 = lax.conv_general_dilated(a2, w3_hwio, (1, 1), 'VALID',
                                  dimension_numbers=dn, precision=hp)
    return x + z3


def _make_params(key, C, Cmid, Cout, eps=1e-5):
    """PyTorch-layout (OIHW) conv weights + eval-mode BN params, deterministic."""
    ks = jax.random.split(key, 16)
    w1_oihw = jax.random.normal(ks[0], (Cmid, C, 1, 1), jnp.float32) / np.sqrt(C)
    w2_oihw = jax.random.normal(ks[1], (Cmid, Cmid, 3, 3), jnp.float32) / np.sqrt(9 * Cmid)
    w3_oihw = jax.random.normal(ks[2], (Cout, Cmid, 1, 1), jnp.float32) / np.sqrt(Cmid)

    def bn(k0, k1, k2, k3, ch):
        gamma = 1.0 + 0.1 * jax.random.normal(k0, (ch,), jnp.float32)
        beta = 0.1 * jax.random.normal(k1, (ch,), jnp.float32)
        mean = 0.1 * jax.random.normal(k2, (ch,), jnp.float32)
        var = jax.random.uniform(k3, (ch,), jnp.float32, 0.5, 1.5)
        s = gamma / jnp.sqrt(var + eps)
        return s, beta - mean * s

    s0, b0 = bn(ks[3], ks[4], ks[5], ks[6], C)
    s1, b1 = bn(ks[7], ks[8], ks[9], ks[10], Cmid)
    s2, b2 = bn(ks[11], ks[12], ks[13], ks[14], Cmid)

    w1_hwio = jnp.transpose(w1_oihw, (2, 3, 1, 0))      # (1,1,C,Cmid)
    w2_hwio = jnp.transpose(w2_oihw, (2, 3, 1, 0))      # (3,3,Cmid,Cmid)
    w3_hwio = jnp.transpose(w3_oihw, (2, 3, 1, 0))      # (1,1,Cmid,Cout)
    hwio = (w1_hwio, w2_hwio, w3_hwio)
    kern = (w1_hwio[0, 0], w2_hwio.reshape(9 * Cmid, Cmid), w3_hwio[0, 0])
    bn_p = (s0, b0, s1, b1, s2, b2)
    return hwio, kern, bn_p, ks[15]


if __name__ == "__main__":
    # --- small channels (C=16, Cmid=4): im2col path, multi-row-tile halos -------
    hwio, kern, bn_p, kx = _make_params(jax.random.PRNGKey(0), 16, 4, 16)
    x = jax.random.normal(kx, (2, 16, 16, 16), jnp.float32)
    ref = np.asarray(jax.block_until_ready(_ref_forward_nhwc(x, *hwio, *bn_p)))

    out32 = residual_block_deep_bn_nhwc(x, *kern, *bn_p,
                                        row_tile=8, compute_dtype=jnp.float32)
    np.testing.assert_allclose(np.asarray(jax.block_until_ready(out32)), ref,
                               rtol=1e-3, atol=1e-3)

    outbf = residual_block_deep_bn_nhwc(x, *kern, *bn_p)   # bf16 default, auto tile
    np.testing.assert_allclose(np.asarray(jax.block_until_ready(outbf)), ref,
                               rtol=5e-2, atol=5e-2)

    # --- bottleneck-sized channels (C=512, Cmid=128): per-tap accumulation path --
    hwio, kern, bn_p, kx = _make_params(jax.random.PRNGKey(1), 512, 128, 512)
    xl = jax.random.normal(kx, (1, 8, 8, 512), jnp.float32)
    refl = np.asarray(jax.block_until_ready(_ref_forward_nhwc(xl, *hwio, *bn_p)))

    outl = residual_block_deep_bn_nhwc(xl, *kern, *bn_p,
                                       row_tile=4, compute_dtype=jnp.float32)
    np.testing.assert_allclose(np.asarray(jax.block_until_ready(outl)), refl,
                               rtol=2e-3, atol=2e-3)

    print("KERNEL_OK")
</pallas_src>

<mosaic_0001>
module attributes {stable_mosaic.version = 11 : i64} {
  func.func @_res_block_kernel(%arg0: i32, %arg1: i32, %arg2: memref<1x8x16x16xf32, #tpu.memory_space<vmem>>, %arg3: memref<1x1x16x16xf32, #tpu.memory_space<vmem>>, %arg4: memref<1x1x16x16xf32, #tpu.memory_space<vmem>>, %arg5: memref<16x4xf32, #tpu.memory_space<vmem>>, %arg6: memref<36x4xf32, #tpu.memory_space<vmem>>, %arg7: memref<4x16xf32, #tpu.memory_space<vmem>>, %arg8: memref<1x16xf32, #tpu.memory_space<vmem>>, %arg9: memref<1x16xf32, #tpu.memory_space<vmem>>, %arg10: memref<1x4xf32, #tpu.memory_space<vmem>>, %arg11: memref<1x4xf32, #tpu.memory_space<vmem>>, %arg12: memref<1x8x16x16xf32, #tpu.memory_space<vmem>>, %arg13: memref<10x18x4xf32, #tpu.memory_space<vmem>>) attributes {dimension_semantics = [#tpu.dimension_semantics<parallel>, #tpu.dimension_semantics<parallel>], iteration_bounds = array<i64: 2, 2>, scalar_prefetch = 0 : i64, scratch_operands = 1 : i64, tpu.core_type = #tpu.core_type<tc>, window_params = [{transform_indices = @transform_0, window_bounds = array<i64: 1, 8, 16, 16>}, {transform_indices = @transform_1, window_bounds = array<i64: 1, 1, 16, 16>}, {transform_indices = @transform_2, window_bounds = array<i64: 1, 1, 16, 16>}, {pipeline_mode = #tpu.pipeline_mode<synchronous>, transform_indices = @transform_3, window_bounds = array<i64: 16, 4>}, {pipeline_mode = #tpu.pipeline_mode<synchronous>, transform_indices = @transform_4, window_bounds = array<i64: 36, 4>}, {pipeline_mode = #tpu.pipeline_mode<synchronous>, transform_indices = @transform_5, window_bounds = array<i64: 4, 16>}, {pipeline_mode = #tpu.pipeline_mode<synchronous>, transform_indices = @transform_6, window_bounds = array<i64: 1, 16>}, {pipeline_mode = #tpu.pipeline_mode<synchronous>, transform_indices = @transform_7, window_bounds = array<i64: 1, 16>}, {pipeline_mode = #tpu.pipeline_mode<synchronous>, transform_indices = @transform_8, window_bounds = array<i64: 1, 4>}, {pipeline_mode = #tpu.pipeline_mode<synchronous>, transform_indices = @transform_9, window_bounds = array<i64: 1, 4>}, {transform_indices = @transform_10, window_bounds = array<i64: 1, 8, 16, 16>}]} {
    %c0 = arith.constant 0 : index
    %c0_0 = arith.constant 0 : index
    %0 = vector.load %arg8[%c0, %c0_0] : memref<1x16xf32, #tpu.memory_space<vmem>>, vector<1x16xf32>
    %c0_1 = arith.constant 0 : index
    %c0_2 = arith.constant 0 : index
    %1 = vector.load %arg9[%c0_1, %c0_2] : memref<1x16xf32, #tpu.memory_space<vmem>>, vector<1x16xf32>
    %c0_3 = arith.constant 0 : index
    %c0_4 = arith.constant 0 : index
    %2 = vector.load %arg10[%c0_3, %c0_4] : memref<1x4xf32, #tpu.memory_space<vmem>>, vector<1x4xf32>
    %c0_5 = arith.constant 0 : index
    %c0_6 = arith.constant 0 : index
    %3 = vector.load %arg5[%c0_5, %c0_6] : memref<16x4xf32, #tpu.memory_space<vmem>>, vector<16x4xf32>
    %c0_7 = arith.constant 0 : index
    %c0_8 = arith.constant 0 : index
    %c0_9 = arith.constant 0 : index
    %c0_10 = arith.constant 0 : index
    %4 = vector.load %arg2[%c0_7, %c0_8, %c0_9, %c0_10] : memref<1x8x16x16xf32, #tpu.memory_space<vmem>>, vector<1x8x16x16xf32>
    %5 = vector.shape_cast %4 : vector<1x8x16x16xf32> to vector<8x16x16xf32>
    %6 = vector.shape_cast %0 : vector<1x16xf32> to vector<1x1x16xf32>
    %7 = vector.broadcast %6 : vector<1x1x16xf32> to vector<8x16x16xf32>
    %8 = arith.mulf %5, %7 : vector<8x16x16xf32>
    %9 = vector.shape_cast %1 : vector<1x16xf32> to vector<1x1x16xf32>
    %10 = vector.broadcast %9 : vector<1x1x16xf32> to vector<8x16x16xf32>
    %11 = arith.addf %8, %10 : vector<8x16x16xf32>
    %cst = arith.constant 0.000000e+00 : f32
    %12 = vector.broadcast %cst : f32 to vector<8x16x16xf32>
    %13 = arith.maximumf %11, %12 : vector<8x16x16xf32>
    %14 = vector.shape_cast %13 : vector<8x16x16xf32> to vector<128x16xf32>
    %cst_11 = arith.constant dense<0.000000e+00> : vector<128x4xf32>
    %15 = tpu.matmul %14, %3, %cst_11 {dimension_numbers = #tpu.dot_dimension_numbers<[1], [0], [0], [1], [0, 0, 1, 1], [], []>} : vector<128x16xf32>, vector<16x4xf32>, vector<128x4xf32> -> vector<128x4xf32>
    %16 = vector.broadcast %2 : vector<1x4xf32> to vector<128x4xf32>
    %17 = arith.addf %15, %16 : vector<128x4xf32>
    %cst_12 = arith.constant 0.000000e+00 : f32
    %18 = vector.broadcast %cst_12 : f32 to vector<128x4xf32>
    %19 = arith.maximumf %17, %18 : vector<128x4xf32>
    %20 = vector.shape_cast %19 : vector<128x4xf32> to vector<8x16x4xf32>
    %c1 = arith.constant 1 : index
    %c1_13 = arith.constant 1 : index
    %c0_14 = arith.constant 0 : index
    %21 = vector.load %arg13[%c1, %c1_13, %c0_14] : memref<10x18x4xf32, #tpu.memory_space<vmem>>, vector<8x16x4xf32>
    tpu.vector_store %arg13[%c1, %c1_13, %c0_14], %20 {strides = array<i32>} : memref<10x18x4xf32, #tpu.memory_space<vmem>>, vector<8x16x4xf32>,
    %c0_15 = arith.constant 0 : index
    %c0_16 = arith.constant 0 : index
    %c0_17 = arith.constant 0 : index
    %c0_18 = arith.constant 0 : index
    %22 = vector.load %arg3[%c0_15, %c0_16, %c0_17, %c0_18] : memref<1x1x16x16xf32, #tpu.memory_space<vmem>>, vector<1x1x16x16xf32>
    %23 = vector.shape_cast %22 : vector<1x1x16x16xf32> to vector<1x16x16xf32>
    %c0_19 = arith.constant 0 : index
    %c0_20 = arith.constant 0 : index
    %c0_21 = arith.constant 0 : index
    %c0_22 = arith.constant 0 : index
    %24 = vector.load %arg4[%c0_19, %c0_20, %c0_21, %c0_22] : memref<1x1x16x16xf32, #tpu.memory_space<vmem>>, vector<1x1x16x16xf32>
    %25 = vector.shape_cast %24 : vector<1x1x16x16xf32> to vector<1x16x16xf32>
    %26 = tpu.concatenate %23, %25 in 0 : vector<1x16x16xf32>, vector<1x16x16xf32> -> vector<2x16x16xf32>
    %27 = vector.shape_cast %0 : vector<1x16xf32> to vector<1x1x16xf32>
    %28 = vector.broadcast %27 : vector<1x1x16xf32> to vector<2x16x16xf32>
    %29 = arith.mulf %26, %28 : vector<2x16x16xf32>
    %30 = vector.shape_cast %1 : vector<1x16xf32> to vector<1x1x16xf32>
    %31 = vector.broadcast %30 : vector<1x1x16xf32> to vector<2x16x16xf32>
    %32 = arith.addf %29, %31 : vector<2x16x16xf32>
    %cst_23 = arith.constant 0.000000e+00 : f32
    %33 = vector.broadcast %cst_23 : f32 to vector<2x16x16xf32>
    %34 = arith.maximumf %32, %33 : vector<2x16x16xf32>
    %35 = vector.shape_cast %34 : vector<2x16x16xf32> to vector<32x16xf32>
    %cst_24 = arith.constant dense<0.000000e+00> : vector<32x4xf32>
    %36 = tpu.matmul %35, %3, %cst_24 {dimension_numbers = #tpu.dot_dimension_numbers<[1], [0], [0], [1], [0, 0, 1, 1], [], []>} : vector<32x16xf32>, vector<16x4xf32>, vector<32x4xf32> -> vector<32x4xf32>
    %37 = vector.broadcast %2 : vector<1x4xf32> to vector<32x4xf32>
    %38 = arith.addf %36, %37 : vector<32x4xf32>
    %cst_25 = arith.constant 0.000000e+00 : f32
    %39 = vector.broadcast %cst_25 : f32 to vector<32x4xf32>
    %40 = arith.maximumf %38, %39 : vector<32x4xf32>
    %41 = vector.shape_cast %40 : vector<32x4xf32> to vector<2x16x4xf32>
    %c0_i32 = arith.constant 0 : i32
    %42 = arith.cmpi sgt, %arg1, %c0_i32 : i32
    %cst_26 = arith.constant 1.000000e+00 : f32
    %cst_27 = arith.constant 0.000000e+00 : f32
    %43 = arith.select %42, %cst_26, %cst_27 : f32
    %c1_i32 = arith.constant 1 : i32
    %44 = arith.cmpi slt, %arg1, %c1_i32 : i32
    %cst_28 = arith.constant 1.000000e+00 : f32
    %cst_29 = arith.constant 0.000000e+00 : f32
    %45 = arith.select %44, %cst_28, %cst_29 : f32
    %46 = vector.extract_strided_slice %41 {offsets = [0, 0, 0], sizes = [1, 16, 4], strides = [1, 1, 1]} : vector<2x16x4xf32> to vector<1x16x4xf32>
    %47 = vector.broadcast %43 : f32 to vector<1x16x4xf32>
    %48 = arith.mulf %46, %47 : vector<1x16x4xf32>
    %c0_30 = arith.constant 0 : index
    %c1_31 = arith.constant 1 : index
    %c0_32 = arith.constant 0 : index
    %49 = vector.load %arg13[%c0_30, %c1_31, %c0_32] : memref<10x18x4xf32, #tpu.memory_space<vmem>>, vector<1x16x4xf32>
    tpu.vector_store %arg13[%c0_30, %c1_31, %c0_32], %48 {strides = array<i32>} : memref<10x18x4xf32, #tpu.memory_space<vmem>>, vector<1x16x4xf32>,
    %50 = vector.extract_strided_slice %41 {offsets = [1, 0, 0], sizes = [1, 16, 4], strides = [1, 1, 1]} : vector<2x16x4xf32> to vector<1x16x4xf32>
    %51 = vector.broadcast %45 : f32 to vector<1x16x4xf32>
    %52 = arith.mulf %50, %51 : vector<1x16x4xf32>
    %c9 = arith.constant 9 : index
    %c1_33 = arith.constant 1 : index
    %c0_34 = arith.constant 0 : index
    %53 = vector.load %arg13[%c9, %c1_33, %c0_34] : memref<10x18x4xf32, #tpu.memory_space<vmem>>, vector<1x16x4xf32>
    tpu.vector_store %arg13[%c9, %c1_33, %c0_34], %52 {strides = array<i32>} : memref<10x18x4xf32, #tpu.memory_space<vmem>>, vector<1x16x4xf32>,
    %cst_35 = arith.constant 0.000000e+00 : f32
    %54 = vector.broadcast %cst_35 : f32 to vector<10x1x4xf32>
    %c0_36 = arith.constant 0 : index
    %c0_37 = arith.constant 0 : index
    %c0_38 = arith.constant 0 : index
    %55 = vector.load %arg13[%c0_36, %c0_37, %c0_38] : memref<10x18x4xf32, #tpu.memory_space<vmem>>, vector<10x1x4xf32>
    tpu.vector_store %arg13[%c0_36, %c0_37, %c0_38], %54 {strides = array<i32>} : memref<10x18x4xf32, #tpu.memory_space<vmem>>, vector<10x1x4xf32>,
    %c0_39 = arith.constant 0 : index
    %c17 = arith.constant 17 : index
    %c0_40 = arith.constant 0 : index
    %56 = vector.load %arg13[%c0_39, %c17, %c0_40] : memref<10x18x4xf32, #tpu.memory_space<vmem>>, vector<10x1x4xf32>
    tpu.vector_store %arg13[%c0_39, %c17, %c0_40], %54 {strides = array<i32>} : memref<10x18x4xf32, #tpu.memory_space<vmem>>, vector<10x1x4xf32>,
    %c0_41 = arith.constant 0 : index
    %c0_42 = arith.constant 0 : index
    %c0_43 = arith.constant 0 : index
    %57 = vector.load %arg13[%c0_41, %c0_42, %c0_43] : memref<10x18x4xf32, #tpu.memory_space<vmem>>, vector<8x16x4xf32>
    %c0_44 = arith.constant 0 : index
    %c1_45 = arith.constant 1 : index
    %c0_46 = arith.constant 0 : index
    %58 = vector.load %arg13[%c0_44, %c1_45, %c0_46] : memref<10x18x4xf32, #tpu.memory_space<vmem>>, vector<8x16x4xf32>
    %c0_47 = arith.constant 0 : index
    %c2 = arith.constant 2 : index
    %c0_48 = arith.constant 0 : index
    %59 = vector.load %arg13[%c0_47, %c2, %c0_48] : memref<10x18x4xf32, #tpu.memory_space<vmem>>, vector<8x16x4xf32>
    %c1_49 = arith.constant 1 : index
    %c0_50 = arith.constant 0 : index
    %c0_51 = arith.constant 0 : index
    %60 = vector.load %arg13[%c1_49, %c0_50, %c0_51] : memref<10x18x4xf32, #tpu.memory_space<vmem>>, vector<8x16x4xf32>
    %c1_52 = arith.constant 1 : index
    %c1_53 = arith.constant 1 : index
    %c0_54 = arith.constant 0 : index
    %61 = vector.load %arg13[%c1_52, %c1_53, %c0_54] : memref<10x18x4xf32, #tpu.memory_space<vmem>>, vector<8x16x4xf32>
    %c1_55 = arith.constant 1 : index
    %c2_56 = arith.constant 2 : index
    %c0_57 = arith.constant 0 : index
    %62 = vector.load %arg13[%c1_55, %c2_56, %c0_57] : memref<10x18x4xf32, #tpu.memory_space<vmem>>, vector<8x16x4xf32>
    %c2_58 = arith.constant 2 : index
    %c0_59 = arith.constant 0 : index
    %c0_60 = arith.constant 0 : index
    %63 = vector.load %arg13[%c2_58, %c0_59, %c0_60] : memref<10x18x4xf32, #tpu.memory_space<vmem>>, vector<8x16x4xf32>
    %c2_61 = arith.constant 2 : index
    %c1_62 = arith.constant 1 : index
    %c0_63 = arith.constant 0 : index
    %64 = vector.load %arg13[%c2_61, %c1_62, %c0_63] : memref<10x18x4xf32, #tpu.memory_space<vmem>>, vector<8x16x4xf32>
    %c2_64 = arith.constant 2 : index
    %c2_65 = arith.constant 2 : index
    %c0_66 = arith.constant 0 : index
    %65 = vector.load %arg13[%c2_64, %c2_65, %c0_66] : memref<10x18x4xf32, #tpu.memory_space<vmem>>, vector<8x16x4xf32>
    %66 = tpu.concatenate %57, %58, %59, %60, %61, %62, %63, %64, %65 in 2 : vector<8x16x4xf32>, vector<8x16x4xf32>, vector<8x16x4xf32>, vector<8x16x4xf32>, vector<8x16x4xf32>, vector<8x16x4xf32>, vector<8x16x4xf32>, vector<8x16x4xf32>, vector<8x16x4xf32> -> vector<8x16x36xf32>
    %67 = vector.shape_cast %66 : vector<8x16x36xf32> to vector<128x36xf32>
    %c0_67 = arith.constant 0 : index
    %c0_68 = arith.constant 0 : index
    %68 = vector.load %arg6[%c0_67, %c0_68] : memref<36x4xf32, #tpu.memory_space<vmem>>, vector<36x4xf32>
    %cst_69 = arith.constant dense<0.000000e+00> : vector<128x4xf32>
    %69 = tpu.matmul %67, %68, %cst_69 {dimension_numbers = #tpu.dot_dimension_numbers<[1], [0], [0], [1], [0, 0, 1, 1], [], []>} : vector<128x36xf32>, vector<36x4xf32>, vector<128x4xf32> -> vector<128x4xf32>
    %c0_70 = arith.constant 0 : index
    %c0_71 = arith.constant 0 : index
    %70 = vector.load %arg11[%c0_70, %c0_71] : memref<1x4xf32, #tpu.memory_space<vmem>>, vector<1x4xf32>
    %71 = vector.broadcast %70 : vector<1x4xf32> to vector<128x4xf32>
    %72 = arith.addf %69, %71 : vector<128x4xf32>
    %cst_72 = arith.constant 0.000000e+00 : f32
    %73 = vector.broadcast %cst_72 : f32 to vector<128x4xf32>
    %74 = arith.maximumf %72, %73 : vector<128x4xf32>
    %c0_73 = arith.constant 0 : index
    %c0_74 = arith.constant 0 : index
    %75 = vector.load %arg7[%c0_73, %c0_74] : memref<4x16xf32, #tpu.memory_space<vmem>>, vector<4x16xf32>
    %cst_75 = arith.constant dense<0.000000e+00> : vector<128x16xf32>
    %76 = tpu.matmul %74, %75, %cst_75 {dimension_numbers = #tpu.dot_dimension_numbers<[1], [0], [0], [1], [0, 0, 1, 1], [], []>} : vector<128x4xf32>, vector<4x16xf32>, vector<128x16xf32> -> vector<128x16xf32>
    %77 = vector.shape_cast %76 : vector<128x16xf32> to vector<8x16x16xf32>
    %78 = arith.addf %77, %5 : vector<8x16x16xf32>
    %c0_76 = arith.constant 0 : index
    %c0_77 = arith.constant 0 : index
    %c0_78 = arith.constant 0 : index
    %c0_79 = arith.constant 0 : index
    %79 = vector.load %arg12[%c0_76, %c0_77, %c0_78, %c0_79] : memref<1x8x16x16xf32, #tpu.memory_space<vmem>>, vector<1x8x16x16xf32>
    %80 = vector.shape_cast %79 : vector<1x8x16x16xf32> to vector<8x16x16xf32>
    %81 = vector.shape_cast %78 : vector<8x16x16xf32> to vector<1x8x16x16xf32>
    tpu.vector_store %arg12[%c0_76, %c0_77, %c0_78, %c0_79], %81 {strides = array<i32>} : memref<1x8x16x16xf32, #tpu.memory_space<vmem>>, vector<1x8x16x16xf32>,
    return
  }
  func.func @transform_0(%arg0: i32, %arg1: i32) -> (i32, i32, i32, i32) {
    %c0_i32 = arith.constant 0 : i32
    %c0_i32_0 = arith.constant 0 : i32
    %c0_i32_1 = arith.constant 0 : i32
    return %arg0, %arg1, %c0_i32, %c0_i32_0 : i32, i32, i32, i32
  }
  func.func @transform_1(%arg0: i32, %arg1: i32) -> (i32, i32, i32, i32) {
    %c8_i32 = arith.constant 8 : i32
    %0 = arith.muli %arg1, %c8_i32 : i32
    %c1_i32 = arith.constant 1 : i32
    %1 = arith.subi %0, %c1_i32 : i32
    %c0_i32 = arith.constant 0 : i32
    %2 = arith.maxsi %1, %c0_i32 : i32
    %c0_i32_0 = arith.constant 0 : i32
    %c0_i32_1 = arith.constant 0 : i32
    %c0_i32_2 = arith.constant 0 : i32
    return %arg0, %2, %c0_i32_0, %c0_i32_1 : i32, i32, i32, i32
  }
  func.func @transform_2(%arg0: i32, %arg1: i32) -> (i32, i32, i32, i32) {
    %c1_i32 = arith.constant 1 : i32
    %0 = arith.addi %arg1, %c1_i32 : i32
    %c8_i32 = arith.constant 8 : i32
    %1 = arith.muli %0, %c8_i32 : i32
    %c15_i32 = arith.constant 15 : i32
    %2 = arith.minsi %1, %c15_i32 : i32
    %c0_i32 = arith.constant 0 : i32
    %c0_i32_0 = arith.constant 0 : i32
    %c0_i32_1 = arith.constant 0 : i32
    return %arg0, %2, %c0_i32, %c0_i32_0 : i32, i32, i32, i32
  }
  func.func @transform_3(%arg0: i32, %arg1: i32) -> (i32, i32) {
    %c0_i32 = arith.constant 0 : i32
    %c0_i32_0 = arith.constant 0 : i32
    %c0_i32_1 = arith.constant 0 : i32
    return %c0_i32, %c0_i32_0 : i32, i32
  }
  func.func @transform_4(%arg0: i32, %arg1: i32) -> (i32, i32) {
    %c0_i32 = arith.constant 0 : i32
    %c0_i32_0 = arith.constant 0 : i32
    %c0_i32_1 = arith.constant 0 : i32
    return %c0_i32, %c0_i32_0 : i32, i32
  }
  func.func @transform_5(%arg0: i32, %arg1: i32) -> (i32, i32) {
    %c0_i32 = arith.constant 0 : i32
    %c0_i32_0 = arith.constant 0 : i32
    %c0_i32_1 = arith.constant 0 : i32
    return %c0_i32, %c0_i32_0 : i32, i32
  }
  func.func @transform_6(%arg0: i32, %arg1: i32) -> (i32, i32) {
    %c0_i32 = arith.constant 0 : i32
    %c0_i32_0 = arith.constant 0 : i32
    %c0_i32_1 = arith.constant 0 : i32
    return %c0_i32, %c0_i32_0 : i32, i32
  }
  func.func @transform_7(%arg0: i32, %arg1: i32) -> (i32, i32) {
    %c0_i32 = arith.constant 0 : i32
    %c0_i32_0 = arith.constant 0 : i32
    %c0_i32_1 = arith.constant 0 : i32
    return %c0_i32, %c0_i32_0 : i32, i32
  }
  func.func @transform_8(%arg0: i32, %arg1: i32) -> (i32, i32) {
    %c0_i32 = arith.constant 0 : i32
    %c0_i32_0 = arith.constant 0 : i32
    %c0_i32_1 = arith.constant 0 : i32
    return %c0_i32, %c0_i32_0 : i32, i32
  }
  func.func @transform_9(%arg0: i32, %arg1: i32) -> (i32, i32) {
    %c0_i32 = arith.constant 0 : i32
    %c0_i32_0 = arith.constant 0 : i32
    %c0_i32_1 = arith.constant 0 : i32
    return %c0_i32, %c0_i32_0 : i32, i32
  }
  func.func @transform_10(%arg0: i32, %arg1: i32) -> (i32, i32, i32, i32) {
    %c0_i32 = arith.constant 0 : i32
    %c0_i32_0 = arith.constant 0 : i32
    %c0_i32_1 = arith.constant 0 : i32
    return %arg0, %arg1, %c0_i32, %c0_i32_0 : i32, i32, i32, i32
  }
}

</mosaic_0001>

<llo_original>
// kernel: tpu_custom_call.1
$region0: #{tpu_custom_call.1}
  #allocation0 [shape = 'u32[]', space=smem, size = 0x4, offset = 0x4, fixed_abs, tag = 'smem constant byte address 0x4 - core index']
  #allocation1 [shape = 'u32[144,128]{1,0:T(1,128)}', space=vmem, size = 0x12000, scoped, tag = 'internal scratch']
  #allocation2 [shape = 'f32[10,18,4]{2,1,0:T(8,128)}', space=vmem, size = 0x1e000, scoped, tag = 'scratch operand']
  %s0 = inlined_call_operand.hbm [shape: f32[2,16,16,16], index: 0, kind: input, shape index: {}]
  %s1 = inlined_call_operand.hbm [shape: f32[2,16,16,16], index: 1, kind: input, shape index: {}]
  %s2 = inlined_call_operand.hbm [shape: f32[2,16,16,16], index: 2, kind: input, shape index: {}]
  %s3 = inlined_call_operand.vmem [shape: f32[16,4], index: 3, kind: input, shape index: {}]
  %s4 = inlined_call_operand.vmem [shape: f32[36,4], index: 4, kind: input, shape index: {}]
  %s5 = inlined_call_operand.vmem [shape: f32[4,16], index: 5, kind: input, shape index: {}]
  %s6 = inlined_call_operand.vmem [shape: f32[1,16], index: 6, kind: input, shape index: {}]
  %s7 = inlined_call_operand.vmem [shape: f32[1,16], index: 7, kind: input, shape index: {}]
  %s8 = inlined_call_operand.vmem [shape: f32[1,4], index: 8, kind: input, shape index: {}]
  %s9 = inlined_call_operand.vmem [shape: f32[1,4], index: 9, kind: input, shape index: {}]
  %s10 = inlined_call_operand.hbm [shape: f32[2,16,16,16], index: 10, kind: output, shape index: {}]
  %s11 = sld [smem:[#allocation0]]
  $region85: #{tpu_custom_call.1} parent=0
    _
  %s13 = ssub.s32 1, %s11
  %s14 = scalar_select 0, %s13, %s11
  $region1: #{tpu_custom_call.1} parent=0
    #allocation3 [shape = 'u8[131072]{0}', space=vmem, size = 0x20000, scoped, tag = 'input window, operand 0']
    #allocation4 [shape = 's32[2]{0}', space=sflag, size = 0x8, scoped, tag = 'scoped memory for tpu_custom_call.1']
    #allocation5 [shape = 's32[2]{0}', space=sflag, size = 0x8, scoped, tag = 'scoped memory for tpu_custom_call.1']
    #allocation6 [shape = 'u8[16384]{0}', space=vmem, size = 0x4000, scoped, tag = 'input window, operand 1']
    #allocation7 [shape = 's32[2]{0}', space=sflag, size = 0x8, scoped, tag = 'scoped memory for tpu_custom_call.1']
    #allocation8 [shape = 'u8[16384]{0}', space=vmem, size = 0x4000, scoped, tag = 'input window, operand 2']
    #allocation9 [shape = 'u8[131072]{0}', space=vmem, size = 0x20000, scoped, tag = 'output window, operand 0']
    %15 = vsyncpa [#allocation4], 0
    %s16 = scalar_lea.sflag [#allocation4], 1
    %17 = vsyncpa %s16, 0
    %18 = vsyncpa [#allocation7], 0
    %s19 = scalar_lea.sflag [#allocation7], 1
    %20 = vsyncpa %s19, 0
    %21 = vsyncpa [#allocation5], 0
    %s22 = scalar_lea.sflag [#allocation5], 1
    %23 = vsyncpa %s22, 0
    loop: start=0, step=1, limit=6
    $region2: #{tpu_custom_call.1} parent=1 // loop_pre_header
      _
    $region3: #{tpu_custom_call.1} parent=1 // loop_header
      %s25 = sphi 0, %s29
      %p26 = scmp.ge.s32.totalorder %s25, 6
      %s32 = sphi 0, %s44
      %s33 = sphi 0, %s40
      %s34 = sphi 0, %s32
      %s35 = sphi 0, %s33
      %s36 = sphi 0, %s34
      %s37 = sphi 0, %s35
      %s49 = sphi 0, %s51
      %s52 = sphi 0, %s49
      %s53 = sphi 0, %s52
      %s69 = sphi 0, %s53
      %s85 = sphi 0, %s87
      %s88 = sphi 0, %s85
      %s89 = sphi 0, %s88
      %s105 = sphi 0, %s89
      %s121 = sphi 0, %s123
      %s124 = sphi 0, %s121
      %s125 = sphi 0, %s124
      %s141 = sphi 0, %s125
      %s145 = sphi 0, %s145
      %s147 = sphi 0, %s145
      %s148 = sphi 0, %s147
      %s162 = sphi 0, %s148
      %s166 = sphi 0, %s166
      %s168 = sphi 0, %s166
      %s169 = sphi 0, %s168
      %s183 = sphi 0, %s169
      %s187 = sphi 0, %s187
      %s189 = sphi 0, %s187
      %s190 = sphi 0, %s189
      %s204 = sphi 0, %s190
      %s208 = sphi 0, %s208
      %s210 = sphi 0, %s208
      %s211 = sphi 0, %s210
      %s225 = sphi 0, %s211
      %s229 = sphi 0, %s229
      %s231 = sphi 0, %s229
      %s232 = sphi 0, %s231
      %s246 = sphi 0, %s232
      %s250 = sphi 0, %s250
      %s252 = sphi 0, %s250
      %s253 = sphi 0, %s252
      %s267 = sphi 0, %s253
      %s271 = sphi 0, %s271
      %s273 = sphi 0, %s271
      %s274 = sphi 0, %s273
      %s288 = sphi 0, %s274
      %s296 = sphi 0, %s298
      %s299 = sphi 0, %s296
      %s300 = sphi 0, %s299
      %s316 = sphi 0, %s300
    $region4: #{tpu_custom_call.1} parent=1 // loop_header_branch
      %28 = sbr.rel (%p26) target = $region8
    $region5: #{tpu_custom_call.1} parent=1 // loop_body
      %s30 = ssub.s32 %s25, 1
      %s31 = ssub.s32 %s25, 2
      %s38 = sadd.s32 1, %s33
      %p39 = scmp.ge.s32.totalorder %s38, 2
      %s40 = scalar_select %p39, 0, %s38
      %s41 = sadd.s32 1, %s32
      %s42 = scalar_select %p39, %s41, %s32
      %p43 = scmp.ge.s32.totalorder %s42, 2
      %s44 = scalar_select %p43, 0, %s42
      %s45 = ssub.s32 %s32, %s44
      %s46 = ssub.s32 %s33, %s40
      %s47 = sor.u32 %s45, %s46
      %p48 = scmp.eq.s32.totalorder %s47, 0
      %s50 = sadd.s32 %s49, 1
      %s51 = scalar_select %p48, %s49, %s50
      %p54 = pneg %p48
      %p55 = scmp.eq.s32.totalorder %s25, 3
      %p56 = por %p54, %p55
      %p57 = scmp.ne.s32.totalorder %s49, %s52
      %p58 = scmp.eq.s32.totalorder %s25, 0
      %p59 = por %p57, %p58
      %p60 = scmp.ne.s32.totalorder %s49, %s52
      %p61 = scmp.eq.s32.totalorder %s30, 3
      %p62 = por %p60, %p61
      %p63 = scmp.ne.s32.totalorder %s52, %s53
      %p64 = scmp.eq.s32.totalorder %s30, 0
      %p65 = por %p63, %p64
      %p66 = scmp.ne.s32.totalorder %s52, %s53
      %p67 = scmp.eq.s32.totalorder %s31, 3
      %p68 = por %p66, %p67
      %p70 = scmp.ne.s32.totalorder %s53, %s69
      %p71 = scmp.eq.s32.totalorder %s31, 0
      %p72 = por %p70, %p71
      %s73 = smul.u32 %s33, 8
      %s74 = ssub.s32 %s73, 1
      %p75 = scmp.gt.s32.totalorder %s74, 0
      %s76 = scalar_select %p75, %s74, 0
      %s77 = smul.u32 %s40, 8
      %s78 = ssub.s32 %s77, 1
      %p79 = scmp.gt.s32.totalorder %s78, 0
      %s80 = scalar_select %p79, %s78, 0
      %s81 = ssub.s32 %s32, %s44
      %s82 = ssub.s32 %s76, %s80
      %s83 = sor.u32 %s81, %s82
      %p84 = scmp.eq.s32.totalorder %s83, 0
      %s86 = sadd.s32 %s85, 1
      %s87 = scalar_select %p84, %s85, %s86
      %p90 = pneg %p84
      %p91 = scmp.eq.s32.totalorder %s25, 3
      %p92 = por %p90, %p91
      %p93 = scmp.ne.s32.totalorder %s85, %s88
      %p94 = scmp.eq.s32.totalorder %s25, 0
      %p95 = por %p93, %p94
      %p96 = scmp.ne.s32.totalorder %s85, %s88
      %p97 = scmp.eq.s32.totalorder %s30, 3
      %p98 = por %p96, %p97
      %p99 = scmp.ne.s32.totalorder %s88, %s89
      %p100 = scmp.eq.s32.totalorder %s30, 0
      %p101 = por %p99, %p100
      %p102 = scmp.ne.s32.totalorder %s88, %s89
      %p103 = scmp.eq.s32.totalorder %s31, 3
      %p104 = por %p102, %p103
      %p106 = scmp.ne.s32.totalorder %s89, %s105
      %p107 = scmp.eq.s32.totalorder %s31, 0
      %p108 = por %p106, %p107
      %s109 = sadd.s32 %s33, 1
      %s110 = smul.u32 %s109, 8
      %p111 = scmp.lt.s32.totalorder %s110, 15
      %s112 = scalar_select %p111, %s110, 15
      %s113 = sadd.s32 %s40, 1
      %s114 = smul.u32 %s113, 8
      %p115 = scmp.lt.s32.totalorder %s114, 15
      %s116 = scalar_select %p115, %s114, 15
      %s117 = ssub.s32 %s32, %s44
      %s118 = ssub.s32 %s112, %s116
      %s119 = sor.u32 %s117, %s118
      %p120 = scmp.eq.s32.totalorder %s119, 0
      %s122 = sadd.s32 %s121, 1
      %s123 = scalar_select %p120, %s121, %s122
      %p126 = pneg %p120
      %p127 = scmp.eq.s32.totalorder %s25, 3
      %p128 = por %p126, %p127
      %p129 = scmp.ne.s32.totalorder %s121, %s124
      %p130 = scmp.eq.s32.totalorder %s25, 0
      %p131 = por %p129, %p130
      %p132 = scmp.ne.s32.totalorder %s121, %s124
      %p133 = scmp.eq.s32.totalorder %s30, 3
      %p134 = por %p132, %p133
      %p135 = scmp.ne.s32.totalorder %s124, %s125
      %p136 = scmp.eq.s32.totalorder %s30, 0
      %p137 = por %p135, %p136
      %p138 = scmp.ne.s32.totalorder %s124, %s125
      %p139 = scmp.eq.s32.totalorder %s31, 3
      %p140 = por %p138, %p139
      %p142 = scmp.ne.s32.totalorder %s125, %s141
      %p143 = scmp.eq.s32.totalorder %s31, 0
      %p144 = por %p142, %p143
      %s146 = sadd.s32 %s145, 1
      %p149 = scmp.eq.s32.totalorder %s25, 3
      %p150 = scmp.ne.s32.totalorder %s145, %s147
      %p151 = scmp.eq.s32.totalorder %s25, 0
      %p152 = por %p150, %p151
      %p153 = scmp.ne.s32.totalorder %s145, %s147
      %p154 = scmp.eq.s32.totalorder %s30, 3
      %p155 = por %p153, %p154
      %p156 = scmp.ne.s32.totalorder %s147, %s148
      %p157 = scmp.eq.s32.totalorder %s30, 0
      %p158 = por %p156, %p157
      %p159 = scmp.ne.s32.totalorder %s147, %s148
      %p160 = scmp.eq.s32.totalorder %s31, 3
      %p161 = por %p159, %p160
      %p163 = scmp.ne.s32.totalorder %s148, %s162
      %p164 = scmp.eq.s32.totalorder %s31, 0
      %p165 = por %p163, %p164
      %s167 = sadd.s32 %s166, 1
      %p170 = scmp.eq.s32.totalorder %s25, 3
      %p171 = scmp.ne.s32.totalorder %s166, %s168
      %p172 = scmp.eq.s32.totalorder %s25, 0
      %p173 = por %p171, %p172
      %p174 = scmp.ne.s32.totalorder %s166, %s168
      %p175 = scmp.eq.s32.totalorder %s30, 3
      %p176 = por %p174, %p175
      %p177 = scmp.ne.s32.totalorder %s168, %s169
      %p178 = scmp.eq.s32.totalorder %s30, 0
      %p179 = por %p177, %p178
      %p180 = scmp.ne.s32.totalorder %s168, %s169
      %p181 = scmp.eq.s32.totalorder %s31, 3
      %p182 = por %p180, %p181
      %p184 = scmp.ne.s32.totalorder %s169, %s183
      %p185 = scmp.eq.s32.totalorder %s31, 0
      %p186 = por %p184, %p185
      %s188 = sadd.s32 %s187, 1
      %p191 = scmp.eq.s32.totalorder %s25, 3
      %p192 = scmp.ne.s32.totalorder %s187, %s189
      %p193 = scmp.eq.s32.totalorder %s25, 0
      %p194 = por %p192, %p193
      %p195 = scmp.ne.s32.totalorder %s187, %s189
      %p196 = scmp.eq.s32.totalorder %s30, 3
      %p197 = por %p195, %p196
      %p198 = scmp.ne.s32.totalorder %s189, %s190
      %p199 = scmp.eq.s32.totalorder %s30, 0
      %p200 = por %p198, %p199
      %p201 = scmp.ne.s32.totalorder %s189, %s190
      %p202 = scmp.eq.s32.totalorder %s31, 3
      %p203 = por %p201, %p202
      %p205 = scmp.ne.s32.totalorder %s190, %s204
      %p206 = scmp.eq.s32.totalorder %s31, 0
      %p207 = por %p205, %p206
      %s209 = sadd.s32 %s208, 1
      %p212 = scmp.eq.s32.totalorder %s25, 3
      %p213 = scmp.ne.s32.totalorder %s208, %s210
      %p214 = scmp.eq.s32.totalorder %s25, 0
      %p215 = por %p213, %p214
      %p216 = scmp.ne.s32.totalorder %s208, %s210
      %p217 = scmp.eq.s32.totalorder %s30, 3
      %p218 = por %p216, %p217
      %p219 = scmp.ne.s32.totalorder %s210, %s211
      %p220 = scmp.eq.s32.totalorder %s30, 0
      %p221 = por %p219, %p220
      %p222 = scmp.ne.s32.totalorder %s210, %s211
      %p223 = scmp.eq.s32.totalorder %s31, 3
      %p224 = por %p222, %p223
      %p226 = scmp.ne.s32.totalorder %s211, %s225
      %p227 = scmp.eq.s32.totalorder %s31, 0
      %p228 = por %p226, %p227
      %s230 = sadd.s32 %s229, 1
      %p233 = scmp.eq.s32.totalorder %s25, 3
      %p234 = scmp.ne.s32.totalorder %s229, %s231
      %p235 = scmp.eq.s32.totalorder %s25, 0
      %p236 = por %p234, %p235
      %p237 = scmp.ne.s32.totalorder %s229, %s231
      %p238 = scmp.eq.s32.totalorder %s30, 3
      %p239 = por %p237, %p238
      %p240 = scmp.ne.s32.totalorder %s231, %s232
      %p241 = scmp.eq.s32.totalorder %s30, 0
      %p242 = por %p240, %p241
      %p243 = scmp.ne.s32.totalorder %s231, %s232
      %p244 = scmp.eq.s32.totalorder %s31, 3
      %p245 = por %p243, %p244
      %p247 = scmp.ne.s32.totalorder %s232, %s246
      %p248 = scmp.eq.s32.totalorder %s31, 0
      %p249 = por %p247, %p248
      %s251 = sadd.s32 %s250, 1
      %p254 = scmp.eq.s32.totalorder %s25, 3
      %p255 = scmp.ne.s32.totalorder %s250, %s252
      %p256 = scmp.eq.s32.totalorder %s25, 0
      %p257 = por %p255, %p256
      %p258 = scmp.ne.s32.totalorder %s250, %s252
      %p259 = scmp.eq.s32.totalorder %s30, 3
      %p260 = por %p258, %p259
      %p261 = scmp.ne.s32.totalorder %s252, %s253
      %p262 = scmp.eq.s32.totalorder %s30, 0
      %p263 = por %p261, %p262
      %p264 = scmp.ne.s32.totalorder %s252, %s253
      %p265 = scmp.eq.s32.totalorder %s31, 3
      %p266 = por %p264, %p265
      %p268 = scmp.ne.s32.totalorder %s253, %s267
      %p269 = scmp.eq.s32.totalorder %s31, 0
      %p270 = por %p268, %p269
      %s272 = sadd.s32 %s271, 1
      %p275 = scmp.eq.s32.totalorder %s25, 3
      %p276 = scmp.ne.s32.totalorder %s271, %s273
      %p277 = scmp.eq.s32.totalorder %s25, 0
      %p278 = por %p276, %p277
      %p279 = scmp.ne.s32.totalorder %s271, %s273
      %p280 = scmp.eq.s32.totalorder %s30, 3
      %p281 = por %p279, %p280
      %p282 = scmp.ne.s32.totalorder %s273, %s274
      %p283 = scmp.eq.s32.totalorder %s30, 0
      %p284 = por %p282, %p283
      %p285 = scmp.ne.s32.totalorder %s273, %s274
      %p286 = scmp.eq.s32.totalorder %s31, 3
      %p287 = por %p285, %p286
      %p289 = scmp.ne.s32.totalorder %s274, %s288
      %p290 = scmp.eq.s32.totalorder %s31, 0
      %p291 = por %p289, %p290
      %s292 = ssub.s32 %s32, %s44
      %s293 = ssub.s32 %s33, %s40
      %s294 = sor.u32 %s292, %s293
      %p295 = scmp.eq.s32.totalorder %s294, 0
      %s297 = sadd.s32 %s296, 1
      %s298 = scalar_select %p295, %s296, %s297
      %p301 = pneg %p295
      %p302 = scmp.eq.s32.totalorder %s25, 3
      %p303 = por %p301, %p302
      %p304 = scmp.ne.s32.totalorder %s296, %s299
      %p305 = scmp.eq.s32.totalorder %s25, 0
      %p306 = por %p304, %p305
      %p307 = scmp.ne.s32.totalorder %s296, %s299
      %p308 = scmp.eq.s32.totalorder %s30, 3
      %p309 = por %p307, %p308
      %p310 = scmp.ne.s32.totalorder %s299, %s300
      %p311 = scmp.eq.s32.totalorder %s30, 0
      %p312 = por %p310, %p311
      %p313 = scmp.ne.s32.totalorder %s299, %s300
      %p314 = scmp.eq.s32.totalorder %s31, 3
      %p315 = por %p313, %p314
      %p317 = scmp.ne.s32.totalorder %s300, %s316
      %p318 = scmp.eq.s32.totalorder %s31, 0
      %p319 = por %p317, %p318
      %p320 = scmp.le.s32.totalorder 1, %s25
      %p321 = scmp.lt.s32.totalorder %s25, 5
      %p322 = pnand %p320, %p321
      %p323 = pneg %p322
      // Predicated region
      $region9: #{tpu_custom_call.1} parent=5 // pred_check
        _
      $region10: #{tpu_custom_call.1} parent=5 // pred_check_branch
        %325 = sbr.rel (%p322) target = $region12
      $region11: #{tpu_custom_call.1} parent=5 // pred_region
        %s326 = ssub.s32 %s25, 1
        // Predicated region
        $region13: #{tpu_custom_call.1} parent=11 // pred_check
          %p327 = pneg %p158
        $region14: #{tpu_custom_call.1} parent=11 // pred_check_branch
          %329 = sbr.rel (%p327) target = $region16
        $region15: #{tpu_custom_call.1} parent=11 // pred_region
          _
        $region16: #{tpu_custom_call.1} parent=11 // pred_fallthru
          _
        // Predicated region
        $region17: #{tpu_custom_call.1} parent=11 // pred_check
          %p330 = pneg %p179
        $region18: #{tpu_custom_call.1} parent=11 // pred_check_branch
          %332 = sbr.rel (%p330) target = $region20
        $region19: #{tpu_custom_call.1} parent=11 // pred_region
          _
        $region20: #{tpu_custom_call.1} parent=11 // pred_fallthru
          _
        // Predicated region
        $region21: #{tpu_custom_call.1} parent=11 // pred_check
          %p333 = pneg %p200
        $region22: #{tpu_custom_call.1} parent=11 // pred_check_branch
          %335 = sbr.rel (%p333) target = $region24
        $region23: #{tpu_custom_call.1} parent=11 // pred_region
          _
        $region24: #{tpu_custom_call.1} parent=11 // pred_fallthru
          _
        // Predicated region
        $region25: #{tpu_custom_call.1} parent=11 // pred_check
          %p336 = pneg %p221
        $region26: #{tpu_custom_call.1} parent=11 // pred_check_branch
          %338 = sbr.rel (%p336) target = $region28
        $region27: #{tpu_custom_call.1} parent=11 // pred_region
          _
        $region28: #{tpu_custom_call.1} parent=11 // pred_fallthru
          _
        // Predicated region
        $region29: #{tpu_custom_call.1} parent=11 // pred_check
          %p339 = pneg %p242
        $region30: #{tpu_custom_call.1} parent=11 // pred_check_branch
          %341 = sbr.rel (%p339) target = $region32
        $region31: #{tpu_custom_call.1} parent=11 // pred_region
          _
        $region32: #{tpu_custom_call.1} parent=11 // pred_fallthru
          _
        // Predicated region
        $region33: #{tpu_custom_call.1} parent=11 // pred_check
          %p342 = pneg %p263
        $region34: #{tpu_custom_call.1} parent=11 // pred_check_branch
          %344 = sbr.rel (%p342) target = $region36
        $region35: #{tpu_custom_call.1} parent=11 // pred_region
          _
        $region36: #{tpu_custom_call.1} parent=11 // pred_fallthru
          _
        // Predicated region
        $region37: #{tpu_custom_call.1} parent=11 // pred_check
          %p345 = pneg %p284
        $region38: #{tpu_custom_call.1} parent=11 // pred_check_branch
          %347 = sbr.rel (%p345) target = $region40
        $region39: #{tpu_custom_call.1} parent=11 // pred_region
          _
        $region40: #{tpu_custom_call.1} parent=11 // pred_fallthru
          _
      $region12: #{tpu_custom_call.1} parent=5 // pred_fallthru
        _
      %p348 = scmp.lt.s32.totalorder %s25, 4
      // Predicated region
      $region41: #{tpu_custom_call.1} parent=5 // pred_check
        %p349 = pneg %p348
      $region42: #{tpu_custom_call.1} parent=5 // pred_check_branch
        %351 = sbr.rel (%p349) target = $region44
      $region43: #{tpu_custom_call.1} parent=5 // pred_region
        // Predicated region
        $region45: #{tpu_custom_call.1} parent=43 // pred_check
          %p352 = pneg %p59
        $region46: #{tpu_custom_call.1} parent=43 // pred_check_branch
          %354 = sbr.rel (%p352) target = $region48
        $region47: #{tpu_custom_call.1} parent=43 // pred_region
          %s355 = sand.u32 %s49, 1
          %s356 = scalar_lea.sflag [#allocation4], %s355
          %s357 = sand.u32 %s49, 1
          %s358 = smul.addr %s357, 128
          %s359 = scalar_lea.vmem [#allocation3], %s358
          %s360 = smul.u32 8, %s33
          %s362 = ssub.s32 2048, 2048
          %363 = vsyncadd %s356, %s362
          %s364 = smul.addr %s360, 2
          %s365 = smul.addr %s32, 32
          %s366 = sadd.s32 %s364, %s365
          %s367 = smul.addr %s366, 128
          %s368 = scalar_lea.hbm %s0, %s367
          %s369 = sshll.u32 %s359, 4
          %s370 = int_to_ptr.vmem [resolvable:$true] %s369
          %375 = dma.hbm_to_vmem [thread:$0]  %s368, 2048, %s370, %s356, 128, 128, 8
        $region48: #{tpu_custom_call.1} parent=43 // pred_fallthru
          _
        // Predicated region
        $region49: #{tpu_custom_call.1} parent=43 // pred_check
          %p376 = pneg %p95
        $region50: #{tpu_custom_call.1} parent=43 // pred_check_branch
          %378 = sbr.rel (%p376) target = $region52
        $region51: #{tpu_custom_call.1} parent=43 // pred_region
          %s379 = sand.u32 %s25, 1
          %s380 = scalar_lea.sflag [#allocation7], %s379
          %s381 = sand.u32 %s85, 1
          %s382 = smul.addr %s381, 16
          %s383 = scalar_lea.vmem [#allocation6], %s382
          %s384 = smul.u32 %s33, 8
          %s385 = ssub.s32 %s384, 1
          %p386 = scmp.gt.s32.totalorder %s385, 0
          %s387 = scalar_select %p386, %s385, 0
          %s389 = ssub.s32 256, 256
          %390 = vsyncadd %s380, %s389
          %s391 = smul.addr %s387, 2
          %s392 = smul.addr %s32, 32
          %s393 = sadd.s32 %s391, %s392
          %s394 = smul.addr %s393, 128
          %s395 = scalar_lea.hbm %s1, %s394
          %s396 = sshll.u32 %s383, 4
          %s397 = int_to_ptr.vmem [resolvable:$true] %s396
          %402 = dma.hbm_to_vmem [thread:$0]  %s395, 256, %s397, %s380, 128, 128, 8
        $region52: #{tpu_custom_call.1} parent=43 // pred_fallthru
          _
        // Predicated region
        $region53: #{tpu_custom_call.1} parent=43 // pred_check
          %p403 = pneg %p131
        $region54: #{tpu_custom_call.1} parent=43 // pred_check_branch
          %405 = sbr.rel (%p403) target = $region56
        $region55: #{tpu_custom_call.1} parent=43 // pred_region
          %s406 = sand.u32 %s25, 1
          %s407 = scalar_lea.sflag [#allocation7], %s406
          %s408 = sand.u32 %s121, 1
          %s409 = smul.addr %s408, 16
          %s410 = scalar_lea.vmem [#allocation8], %s409
          %s411 = sadd.s32 %s33, 1
          %s412 = smul.u32 %s411, 8
          %p413 = scmp.lt.s32.totalorder %s412, 15
          %s414 = scalar_select %p413, %s412, 15
          %s416 = ssub.s32 256, 256
          %417 = vsyncadd %s407, %s416
          %s418 = smul.addr %s414, 2
          %s419 = smul.addr %s32, 32
          %s420 = sadd.s32 %s418, %s419
          %s421 = smul.addr %s420, 128
          %s422 = scalar_lea.hbm %s2, %s421
          %s423 = sshll.u32 %s410, 4
          %s424 = int_to_ptr.vmem [resolvable:$true] %s423
          %429 = dma.hbm_to_vmem [thread:$0]  %s422, 256, %s424, %s407, 128, 128, 8
        $region56: #{tpu_custom_call.1} parent=43 // pred_fallthru
          _
      $region44: #{tpu_custom_call.1} parent=5 // pred_fallthru
        _
      %p430 = scmp.le.s32.totalorder 1, %s25
      %p431 = scmp.lt.s32.totalorder %s25, 5
      %p432 = pnand %p430, %p431
      %p433 = pneg %p432
      // Predicated region
      $region57: #{tpu_custom_call.1} parent=5 // pred_check
        _
      $region58: #{tpu_custom_call.1} parent=5 // pred_check_branch
        %435 = sbr.rel (%p432) target = $region60
      $region59: #{tpu_custom_call.1} parent=5 // pred_region
        %s436 = ssub.s32 %s25, 1
        %s437 = sand.u32 %s52, 1
        %s438 = scalar_lea.sflag [#allocation4], %s437
        %s439 = sand.u32 %s52, 1
        %s440 = smul.addr %s439, 128
        %s441 = scalar_lea.vmem [#allocation3], %s440
        // Predicated region
        $region61: #{tpu_custom_call.1} parent=59 // pred_check
          %p442 = pneg %p65
        $region62: #{tpu_custom_call.1} parent=59 // pred_check_branch
          %444 = sbr.rel (%p442) target = $region64
        $region63: #{tpu_custom_call.1} parent=59 // pred_region
          %445 = dma.done %s438, 2048
        $region64: #{tpu_custom_call.1} parent=59 // pred_fallthru
          _
        %s446 = sand.u32 %s30, 1
        %s447 = scalar_lea.sflag [#allocation7], %s446
        %s448 = sand.u32 %s88, 1
        %s449 = smul.addr %s448, 16
        %s450 = scalar_lea.vmem [#allocation6], %s449
        // Predicated region
        $region65: #{tpu_custom_call.1} parent=59 // pred_check
          %p451 = pneg %p101
        $region66: #{tpu_custom_call.1} parent=59 // pred_check_branch
          %453 = sbr.rel (%p451) target = $region68
        $region67: #{tpu_custom_call.1} parent=59 // pred_region
          %454 = dma.done %s447, 256
        $region68: #{tpu_custom_call.1} parent=59 // pred_fallthru
          _
        %s455 = sand.u32 %s30, 1
        %s456 = scalar_lea.sflag [#allocation7], %s455
        %s457 = sand.u32 %s124, 1
        %s458 = smul.addr %s457, 16
        %s459 = scalar_lea.vmem [#allocation8], %s458
        // Predicated region
        $region69: #{tpu_custom_call.1} parent=59 // pred_check
          %p460 = pneg %p137
        $region70: #{tpu_custom_call.1} parent=59 // pred_check_branch
          %462 = sbr.rel (%p460) target = $region72
        $region71: #{tpu_custom_call.1} parent=59 // pred_region
          %463 = dma.done %s456, 256
        $region72: #{tpu_custom_call.1} parent=59 // pred_fallthru
          _
        %s464 = sand.u32 %s52, 1
        %s465 = scalar_lea.sflag [#allocation4], %s464
        %s466 = sand.u32 %s52, 1
        %s467 = smul.addr %s466, 128
        %s468 = scalar_lea.vmem [#allocation3], %s467
        %p469 = pneg %p65
        %p470 = pneg %p62
        %s471 = sand.u32 %s30, 1
        %s472 = scalar_lea.sflag [#allocation7], %s471
        %s473 = sand.u32 %s88, 1
        %s474 = smul.addr %s473, 16
        %s475 = scalar_lea.vmem [#allocation6], %s474
        %p476 = pneg %p101
        %p477 = pneg %p98
        %s478 = sand.u32 %s30, 1
        %s479 = scalar_lea.sflag [#allocation7], %s478
        %s480 = sand.u32 %s124, 1
        %s481 = smul.addr %s480, 16
        %s482 = scalar_lea.vmem [#allocation8], %s481
        %p483 = pneg %p137
        %p484 = pneg %p134
        %p485 = pneg %p158
        %p486 = pneg %p155
        %p487 = pneg %p179
        %p488 = pneg %p176
        %p489 = pneg %p200
        %p490 = pneg %p197
        %p491 = pneg %p221
        %p492 = pneg %p218
        %p493 = pneg %p242
        %p494 = pneg %p239
        %p495 = pneg %p263
        %p496 = pneg %p260
        %p497 = pneg %p284
        %p498 = pneg %p281
        %p499 = pneg %p312
        %p500 = pneg %p309
        %s501 = sand.u32 %s299, 1
        %s502 = scalar_lea.sflag [#allocation5], %s501
        %s503 = sand.u32 %s299, 1
        %s504 = smul.addr %s503, 128
        %s505 = scalar_lea.vmem [#allocation9], %s504
        %s506 = smul.u32 8, %s35
        %s507 = smul.u32 %s35, 8
        %s508 = ssub.s32 %s507, 1
        %p509 = scmp.gt.s32.totalorder %s508, 0
        %s510 = scalar_select %p509, %s508, 0
        %s511 = sadd.s32 %s35, 1
        %s512 = smul.u32 %s511, 8
        %p513 = scmp.lt.s32.totalorder %s512, 15
        %s514 = scalar_select %p513, %s512, 15
        %s515 = smul.u32 8, %s35
        %v516 = vld [vmem:[%s6] sm:$0x1]
        %v517 = vld [vmem:[%s7] sm:$0x1]
        %v518 = vld [vmem:[%s8] sm:$0x1]
        %v519 = vld [vmem:[%s3] sm:$0xff]
        %v520 = vld [vmem:[%s3 + $0x8] sm:$0xff]
        %v521 = vld [vmem:[%s441] sm:$0xff]
        %v522 = vld [vmem:[%s441 + $0x8] sm:$0xff]
        %v523 = vld [vmem:[%s441 + $0x10] sm:$0xff]
        %v524 = vld [vmem:[%s441 + $0x18] sm:$0xff]
        %v525 = vld [vmem:[%s441 + $0x20] sm:$0xff]
        %v526 = vld [vmem:[%s441 + $0x28] sm:$0xff]
        %v527 = vld [vmem:[%s441 + $0x30] sm:$0xff]
        %v528 = vld [vmem:[%s441 + $0x38] sm:$0xff]
        %v529 = vld [vmem:[%s441 + $0x40] sm:$0xff]
        %v530 = vld [vmem:[%s441 + $0x48] sm:$0xff]
        %v531 = vld [vmem:[%s441 + $0x50] sm:$0xff]
        %v532 = vld [vmem:[%s441 + $0x58] sm:$0xff]
        %v533 = vld [vmem:[%s441 + $0x60] sm:$0xff]
        %v534 = vld [vmem:[%s441 + $0x68] sm:$0xff]
        %v535 = vld [vmem:[%s441 + $0x70] sm:$0xff]
        %v536 = vld [vmem:[%s441 + $0x78] sm:$0xff]
        %v538 = vlaneseq
        %v539 = vshrl.u32 %v538, 7
        %v540 = vsub.s32 0, %v539
        %v541 = vrot.slane %v516, %v540
        %v543 = vmul.f32 %v521, %v541
        %v544 = vmul.f32 %v522, %v541
        %v545 = vmul.f32 %v523, %v541
        %v546 = vmul.f32 %v524, %v541
        %v547 = vmul.f32 %v525, %v541
        %v548 = vmul.f32 %v526, %v541
        %v549 = vmul.f32 %v527, %v541
        %v550 = vmul.f32 %v528, %v541
        %v551 = vmul.f32 %v529, %v541
        %v552 = vmul.f32 %v530, %v541
        %v553 = vmul.f32 %v531, %v541
        %v554 = vmul.f32 %v532, %v541
        %v555 = vmul.f32 %v533, %v541
        %v556 = vmul.f32 %v534, %v541
        %v557 = vmul.f32 %v535, %v541
        %v558 = vmul.f32 %v536, %v541
        %v560 = vlaneseq
        %v561 = vshrl.u32 %v560, 7
        %v562 = vsub.s32 0, %v561
        %v563 = vrot.slane %v517, %v562
        %v565 = vadd.f32 %v543, %v563
        %v566 = vadd.f32 %v544, %v563
        %v567 = vadd.f32 %v545, %v563
        %v568 = vadd.f32 %v546, %v563
        %v569 = vadd.f32 %v547, %v563
        %v570 = vadd.f32 %v548, %v563
        %v571 = vadd.f32 %v549, %v563
        %v572 = vadd.f32 %v550, %v563
        %v573 = vadd.f32 %v551, %v563
        %v574 = vadd.f32 %v552, %v563
        %v575 = vadd.f32 %v553, %v563
        %v576 = vadd.f32 %v554, %v563
        %v577 = vadd.f32 %v555, %v563
        %v578 = vadd.f32 %v556, %v563
        %v579 = vadd.f32 %v557, %v563
        %v580 = vadd.f32 %v558, %v563
        %v581 = vmax.f32 %v565, 0.0
        %v582 = vmax.f32 %v566, 0.0
        %v583 = vmax.f32 %v567, 0.0
        %v584 = vmax.f32 %v568, 0.0
        %v585 = vmax.f32 %v569, 0.0
        %v586 = vmax.f32 %v570, 0.0
        %v587 = vmax.f32 %v571, 0.0
        %v588 = vmax.f32 %v572, 0.0
        %v589 = vmax.f32 %v573, 0.0
        %v590 = vmax.f32 %v574, 0.0
        %v591 = vmax.f32 %v575, 0.0
        %v592 = vmax.f32 %v576, 0.0
        %v593 = vmax.f32 %v577, 0.0
        %v594 = vmax.f32 %v578, 0.0
        %v595 = vmax.f32 %v579, 0.0
        %v596 = vmax.f32 %v580, 0.0
        %v598 = vlaneseq
        %v599 = vshrl.u32 %v598, 7
        %v600 = vsub.s32 0, %v599
        %v601 = vrot.slane %v518, %v600
        %vm603 = vcmask 130048
        %v605 = vsel %vm603, %v581, 0
        %v608 = vsel %vm603, %v582, 0
        %v611 = vsel %vm603, %v583, 0
        %v614 = vsel %vm603, %v584, 0
        %v617 = vsel %vm603, %v585, 0
        %v620 = vsel %vm603, %v586, 0
        %v623 = vsel %vm603, %v587, 0
        %v626 = vsel %vm603, %v588, 0
        %v629 = vsel %vm603, %v589, 0
        %v632 = vsel %vm603, %v590, 0
        %v635 = vsel %vm603, %v591, 0
        %v638 = vsel %vm603, %v592, 0
        %v641 = vsel %vm603, %v593, 0
        %v644 = vsel %vm603, %v594, 0
        %v647 = vsel %vm603, %v595, 0
        %v650 = vsel %vm603, %v596, 0
        %652 = vmatprep.subr.mxu0 0.0
        %653 = vmatpush1.msra.mxu0 %v519
        %654 = vmatprep.subr.mxu0 0.0
        %655 = vmatpush1.msra.mxu0 %v520
        %656 = vmatprep.subr.mxu0 0.0
        %657 = vmatpush1.msra.mxu0 0.0
        %658 = vmatprep.subr.mxu0 0.0
        %659 = vmatpush1.msra.mxu0 0.0
        %660 = vmatprep.subr.mxu0 0.0
        %661 = vmatpush1.msra.mxu0 0.0
        %662 = vmatprep.subr.mxu0 0.0
        %663 = vmatpush1.msra.mxu0 0.0
        %664 = vmatprep.subr.mxu0 0.0
        %665 = vmatpush1.msra.mxu0 0.0
        %666 = vmatprep.subr.mxu0 0.0
        %667 = vmatpush1.msra.mxu0 0.0
        %668 = vmatprep.subr.mxu0 0.0
        %669 = vmatpush1.msra.mxu0 0.0
        %670 = vmatprep.subr.mxu0 0.0
        %671 = vmatpush1.msra.mxu0 0.0
        %672 = vmatprep.subr.mxu0 0.0
        %673 = vmatpush1.msra.mxu0 0.0
        %674 = vmatprep.subr.mxu0 0.0
        %675 = vmatpush1.msra.mxu0 0.0
        %676 = vmatprep.subr.mxu0 0.0
        %677 = vmatpush1.msra.mxu0 0.0
        %678 = vmatprep.subr.mxu0 0.0
        %679 = vmatpush1.msra.mxu0 0.0
        %680 = vmatprep.subr.mxu0 0.0
        %681 = vmatpush1.msra.mxu0 0.0
        %682 = vmatprep.subr.mxu0 0.0
        %683 = vmatpush1.msra.mxu0 0.0
        %684 = vmatprep.subr.mxu0 0.0
        %685 = vmatpush1.msra.mxu0 0.0
        %686 = vmatprep.subr.mxu0 0.0
        %687 = vmatpush1.msra.mxu0 0.0
        %688 = vmatprep.subr.mxu0 0.0
        %689 = vmatpush1.msra.mxu0 0.0
        %690 = vmatprep.subr.mxu0 0.0
        %691 = vmatpush1.msra.mxu0 0.0
        %692 = vmatprep.subr.mxu0 0.0
        %693 = vmatpush1.msra.mxu0 0.0
        %694 = vmatprep.subr.mxu0 0.0
        %695 = vmatpush1.msra.mxu0 0.0
        %696 = vmatprep.subr.mxu0 0.0
        %697 = vmatpush1.msra.mxu0 0.0
        %698 = vmatprep.subr.mxu0 0.0
        %699 = vmatpush1.msra.mxu0 0.0
        %700 = vmatprep.subr.mxu0 0.0
        %701 = vmatpush1.msra.mxu0 0.0
        %702 = vmatprep.subr.mxu0 0.0
        %703 = vmatpush1.msra.mxu0 0.0
        %704 = vmatprep.subr.mxu0 0.0
        %705 = vmatpush1.msra.mxu0 0.0
        %706 = vmatprep.subr.mxu0 0.0
        %707 = vmatpush1.msra.mxu0 0.0
        %708 = vmatprep.subr.mxu0 0.0
        %709 = vmatpush1.msra.mxu0 0.0
        %710 = vmatprep.subr.mxu0 0.0
        %711 = vmatpush1.msra.mxu0 0.0
        %712 = vmatprep.subr.mxu0 0.0
        %713 = vmatpush1.msra.mxu0 0.0
        %714 = vmatprep.subr.mxu0 0.0
        %715 = vmatpush1.msra.mxu0 0.0
        %716 = vmatprep.mubr.f32.mxu0 0.0
        %717 = vmatmul.mubr.f32.gmra.mrb[0].mxu0 %v605
        %v718 = vpop.f32.mrb[0].mxu0
        %v719 = vadd.f32 %v601, %v718
        %v720 = vpop.f32.mrb[0].mxu0
        %721 = vmatprep.mubr.f32.mxu0 0.0
        %722 = vmatmul.mubr.f32.gmra.mrb[0].mxu0 %v608
        %v723 = vpop.f32.mrb[0].mxu0
        %v724 = vadd.f32 %v601, %v723
        %v725 = vpop.f32.mrb[0].mxu0
        %726 = vmatprep.mubr.f32.mxu0 0.0
        %727 = vmatmul.mubr.f32.gmra.mrb[0].mxu0 %v611
        %v728 = vpop.f32.mrb[0].mxu0
        %v729 = vadd.f32 %v601, %v728
        %v730 = vpop.f32.mrb[0].mxu0
        %731 = vmatprep.mubr.f32.mxu0 0.0
        %732 = vmatmul.mubr.f32.gmra.mrb[0].mxu0 %v614
        %v733 = vpop.f32.mrb[0].mxu0
        %v734 = vadd.f32 %v601, %v733
        %v735 = vpop.f32.mrb[0].mxu0
        %736 = vmatprep.mubr.f32.mxu0 0.0
        %737 = vmatmul.mubr.f32.gmra.mrb[0].mxu0 %v617
        %v738 = vpop.f32.mrb[0].mxu0
        %v739 = vadd.f32 %v601, %v738
        %v740 = vpop.f32.mrb[0].mxu0
        %741 = vmatprep.mubr.f32.mxu0 0.0
        %742 = vmatmul.mubr.f32.gmra.mrb[0].mxu0 %v620
        %v743 = vpop.f32.mrb[0].mxu0
        %v744 = vadd.f32 %v601, %v743
        %v745 = vpop.f32.mrb[0].mxu0
        %746 = vmatprep.mubr.f32.mxu0 0.0
        %747 = vmatmul.mubr.f32.gmra.mrb[0].mxu0 %v623
        %v748 = vpop.f32.mrb[0].mxu0
        %v749 = vadd.f32 %v601, %v748
        %v750 = vpop.f32.mrb[0].mxu0
        %751 = vmatprep.mubr.f32.mxu0 0.0
        %752 = vmatmul.mubr.f32.gmra.mrb[0].mxu0 %v626
        %v753 = vpop.f32.mrb[0].mxu0
        %v754 = vadd.f32 %v601, %v753
        %v755 = vpop.f32.mrb[0].mxu0
        %756 = vmatprep.mubr.f32.mxu0 0.0
        %757 = vmatmul.mubr.f32.gmra.mrb[0].mxu0 %v629
        %v758 = vpop.f32.mrb[0].mxu0
        %v759 = vadd.f32 %v601, %v758
        %v760 = vpop.f32.mrb[0].mxu0
        %761 = vmatprep.mubr.f32.mxu0 0.0
        %762 = vmatmul.mubr.f32.gmra.mrb[0].mxu0 %v632
        %v763 = vpop.f32.mrb[0].mxu0
        %v764 = vadd.f32 %v601, %v763
        %v765 = vpop.f32.mrb[0].mxu0
        %766 = vmatprep.mubr.f32.mxu0 0.0
        %767 = vmatmul.mubr.f32.gmra.mrb[0].mxu0 %v635
        %v768 = vpop.f32.mrb[0].mxu0
        %v769 = vadd.f32 %v601, %v768
        %v770 = vpop.f32.mrb[0].mxu0
        %771 = vmatprep.mubr.f32.mxu0 0.0
        %772 = vmatmul.mubr.f32.gmra.mrb[0].mxu0 %v638
        %v773 = vpop.f32.mrb[0].mxu0
        %v774 = vadd.f32 %v601, %v773
        %v775 = vpop.f32.mrb[0].mxu0
        %776 = vmatprep.mubr.f32.mxu0 0.0
        %777 = vmatmul.mubr.f32.gmra.mrb[0].mxu0 %v641
        %v778 = vpop.f32.mrb[0].mxu0
        %v779 = vadd.f32 %v601, %v778
        %v780 = vpop.f32.mrb[0].mxu0
        %781 = vmatprep.mubr.f32.mxu0 0.0
        %782 = vmatmul.mubr.f32.gmra.mrb[0].mxu0 %v644
        %v783 = vpop.f32.mrb[0].mxu0
        %v784 = vadd.f32 %v601, %v783
        %v785 = vpop.f32.mrb[0].mxu0
        %786 = vmatprep.mubr.f32.mxu0 0.0
        %787 = vmatmul.mubr.f32.gmra.mrb[0].mxu0 %v647
        %v788 = vpop.f32.mrb[0].mxu0
        %v789 = vadd.f32 %v601, %v788
        %v790 = vpop.f32.mrb[0].mxu0
        %791 = vmatprep.mubr.f32.mxu0 0.0
        %792 = vmatmul.mubr.f32.gmra.mrb[0].mxu0 %v650
        %v793 = vpop.f32.mrb[0].mxu0
        %v794 = vadd.f32 %v601, %v793
        %v795 = vpop.f32.mrb[0].mxu0
        %796 = vdwg.mxu0
        %v797 = vmax.f32 %v719, 0.0
        %v798 = vmax.f32 %v724, 0.0
        %v799 = vmax.f32 %v729, 0.0
        %v800 = vmax.f32 %v734, 0.0
        %v801 = vmax.f32 %v739, 0.0
        %v802 = vmax.f32 %v744, 0.0
        %v803 = vmax.f32 %v749, 0.0
        %v804 = vmax.f32 %v754, 0.0
        %v805 = vmax.f32 %v759, 0.0
        %v806 = vmax.f32 %v764, 0.0
        %v807 = vmax.f32 %v769, 0.0
        %v808 = vmax.f32 %v774, 0.0
        %v809 = vmax.f32 %v779, 0.0
        %v810 = vmax.f32 %v784, 0.0
        %v811 = vmax.f32 %v789, 0.0
        %v812 = vmax.f32 %v794, 0.0
        %s813 = scalar_lea.vmem [#allocation2], 24
        %vm814 = vcmask 31744
        %815 = vst.msk [vmem:[%s813 + $0x1] sm:$0xff] %vm814, %v797
        %816 = vst.msk [vmem:[%s813 + $0x9] sm:$0xff] %vm814, %v798
        %817 = vst.msk [vmem:[%s813 + $0x19] sm:$0xff] %vm814, %v799
        %818 = vst.msk [vmem:[%s813 + $0x21] sm:$0xff] %vm814, %v800
        %819 = vst.msk [vmem:[%s813 + $0x31] sm:$0xff] %vm814, %v801
        %820 = vst.msk [vmem:[%s813 + $0x39] sm:$0xff] %vm814, %v802
        %821 = vst.msk [vmem:[%s813 + $0x49] sm:$0xff] %vm814, %v803
        %822 = vst.msk [vmem:[%s813 + $0x51] sm:$0xff] %vm814, %v804
        %823 = vst.msk [vmem:[%s813 + $0x61] sm:$0xff] %vm814, %v805
        %824 = vst.msk [vmem:[%s813 + $0x69] sm:$0xff] %vm814, %v806
        %825 = vst.msk [vmem:[%s813 + $0x79] sm:$0xff] %vm814, %v807
        %826 = vst.msk [vmem:[%s813 + $0x81] sm:$0xff] %vm814, %v808
        %827 = vst.msk [vmem:[%s813 + $0x91] sm:$0xff] %vm814, %v809
        %828 = vst.msk [vmem:[%s813 + $0x99] sm:$0xff] %vm814, %v810
        %829 = vst.msk [vmem:[%s813 + $0xa9] sm:$0xff] %vm814, %v811
        %830 = vst.msk [vmem:[%s813 + $0xb1] sm:$0xff] %vm814, %v812
        %v831 = vld [vmem:[%s450] sm:$0xff]
        %v832 = vld [vmem:[%s450 + $0x8] sm:$0xff]
        %v833 = vld [vmem:[%s459] sm:$0xff]
        %v834 = vld [vmem:[%s459 + $0x8] sm:$0xff]
        %v835 = vmul.f32 %v831, %v541
        %v836 = vmul.f32 %v832, %v541
        %v837 = vmul.f32 %v833, %v541
        %v838 = vmul.f32 %v834, %v541
        %v839 = vadd.f32 %v835, %v563
        %v840 = vadd.f32 %v836, %v563
        %v841 = vadd.f32 %v837, %v563
        %v842 = vadd.f32 %v838, %v563
        %v843 = vmax.f32 %v839, 0.0
        %v844 = vmax.f32 %v840, 0.0
        %v845 = vmax.f32 %v841, 0.0
        %v846 = vmax.f32 %v842, 0.0
        %v848 = vsel %vm603, %v843, 0
        %v851 = vsel %vm603, %v844, 0
        %v854 = vsel %vm603, %v845, 0
        %v857 = vsel %vm603, %v846, 0
        %859 = vmatprep.subr.mxu0 0.0
        %860 = vmatpush1.msra.mxu0 %v519
        %861 = vmatprep.subr.mxu0 0.0
        %862 = vmatpush1.msra.mxu0 %v520
        %863 = vmatprep.subr.mxu0 0.0
        %864 = vmatpush1.msra.mxu0 0.0
        %865 = vmatprep.subr.mxu0 0.0
        %866 = vmatpush1.msra.mxu0 0.0
        %867 = vmatprep.subr.mxu0 0.0
        %868 = vmatpush1.msra.mxu0 0.0
        %869 = vmatprep.subr.mxu0 0.0
        %870 = vmatpush1.msra.mxu0 0.0
        %871 = vmatprep.subr.mxu0 0.0
        %872 = vmatpush1.msra.mxu0 0.0
        %873 = vmatprep.subr.mxu0 0.0
        %874 = vmatpush1.msra.mxu0 0.0
        %875 = vmatprep.subr.mxu0 0.0
        %876 = vmatpush1.msra.mxu0 0.0
        %877 = vmatprep.subr.mxu0 0.0
        %878 = vmatpush1.msra.mxu0 0.0
        %879 = vmatprep.subr.mxu0 0.0
        %880 = vmatpush1.msra.mxu0 0.0
        %881 = vmatprep.subr.mxu0 0.0
        %882 = vmatpush1.msra.mxu0 0.0
        %883 = vmatprep.subr.mxu0 0.0
        %884 = vmatpush1.msra.mxu0 0.0
        %885 = vmatprep.subr.mxu0 0.0
        %886 = vmatpush1.msra.mxu0 0.0
        %887 = vmatprep.subr.mxu0 0.0
        %888 = vmatpush1.msra.mxu0 0.0
        %889 = vmatprep.subr.mxu0 0.0
        %890 = vmatpush1.msra.mxu0 0.0
        %891 = vmatprep.subr.mxu0 0.0
        %892 = vmatpush1.msra.mxu0 0.0
        %893 = vmatprep.subr.mxu0 0.0
        %894 = vmatpush1.msra.mxu0 0.0
        %895 = vmatprep.subr.mxu0 0.0
        %896 = vmatpush1.msra.mxu0 0.0
        %897 = vmatprep.subr.mxu0 0.0
        %898 = vmatpush1.msra.mxu0 0.0
        %899 = vmatprep.subr.mxu0 0.0
        %900 = vmatpush1.msra.mxu0 0.0
        %901 = vmatprep.subr.mxu0 0.0
        %902 = vmatpush1.msra.mxu0 0.0
        %903 = vmatprep.subr.mxu0 0.0
        %904 = vmatpush1.msra.mxu0 0.0
        %905 = vmatprep.subr.mxu0 0.0
        %906 = vmatpush1.msra.mxu0 0.0
        %907 = vmatprep.subr.mxu0 0.0
        %908 = vmatpush1.msra.mxu0 0.0
        %909 = vmatprep.subr.mxu0 0.0
        %910 = vmatpush1.msra.mxu0 0.0
        %911 = vmatprep.subr.mxu0 0.0
        %912 = vmatpush1.msra.mxu0 0.0
        %913 = vmatprep.subr.mxu0 0.0
        %914 = vmatpush1.msra.mxu0 0.0
        %915 = vmatprep.subr.mxu0 0.0
        %916 = vmatpush1.msra.mxu0 0.0
        %917 = vmatprep.subr.mxu0 0.0
        %918 = vmatpush1.msra.mxu0 0.0
        %919 = vmatprep.subr.mxu0 0.0
        %920 = vmatpush1.msra.mxu0 0.0
        %921 = vmatprep.subr.mxu0 0.0
        %922 = vmatpush1.msra.mxu0 0.0
        %923 = vmatprep.mubr.f32.mxu0 0.0
        %924 = vmatmul.mubr.f32.gmra.mrb[0].mxu0 %v848
        %v925 = vpop.f32.mrb[0].mxu0
        %v926 = vadd.f32 %v601, %v925
        %v927 = vpop.f32.mrb[0].mxu0
        %928 = vmatprep.mubr.f32.mxu0 0.0
        %929 = vmatmul.mubr.f32.gmra.mrb[0].mxu0 %v851
        %v930 = vpop.f32.mrb[0].mxu0
        %v931 = vadd.f32 %v601, %v930
        %v932 = vpop.f32.mrb[0].mxu0
        %933 = vmatprep.mubr.f32.mxu0 0.0
        %934 = vmatmul.mubr.f32.gmra.mrb[0].mxu0 %v854
        %v935 = vpop.f32.mrb[0].mxu0
        %v936 = vadd.f32 %v601, %v935
        %v937 = vpop.f32.mrb[0].mxu0
        %938 = vmatprep.mubr.f32.mxu0 0.0
        %939 = vmatmul.mubr.f32.gmra.mrb[0].mxu0 %v857
        %v940 = vpop.f32.mrb[0].mxu0
        %v941 = vadd.f32 %v601, %v940
        %v942 = vpop.f32.mrb[0].mxu0
        %943 = vdwg.mxu0
        %v944 = vmax.f32 %v926, 0.0
        %v945 = vmax.f32 %v931, 0.0
        %v946 = vmax.f32 %v936, 0.0
        %v947 = vmax.f32 %v941, 0.0
        %p948 = scmp.gt.s32.totalorder %s35, 0
        %s949 = scalar_select %p948, 1.0, 0.0
        %p950 = scmp.lt.s32.totalorder %s35, 1
        %s951 = scalar_select %p950, 1.0, 0.0
        %v952 = vstv %s949
        %v953 = vmul.f32 %v944, %v952
        %v954 = vmul.f32 %v945, %v952
        %955 = vst.msk [vmem:[#allocation2 + $0x1] sm:$0xff] %vm814, %v953
        %956 = vst.msk [vmem:[#allocation2 + $0x9] sm:$0xff] %vm814, %v954
        %v957 = vstv %s951
        %v958 = vmul.f32 %v946, %v957
        %v959 = vmul.f32 %v947, %v957
        %s960 = scalar_lea.vmem [#allocation2], 216
        %961 = vst.msk [vmem:[%s960 + $0x1] sm:$0xff] %vm814, %v958
        %962 = vst.msk [vmem:[%s960 + $0x9] sm:$0xff] %vm814, %v959
        %vm963 = vcmask 24576
        %964 = vst.msk [vmem:[#allocation2] sm:$0x1] %vm963, 0.0
        %965 = vst.msk [vmem:[#allocation2 + $0x18] sm:$0x1] %vm963, 0.0
        %966 = vst.msk [vmem:[#allocation2 + $0x30] sm:$0x1] %vm963, 0.0
        %967 = vst.msk [vmem:[#allocation2 + $0x48] sm:$0x1] %vm963, 0.0
        %968 = vst.msk [vmem:[#allocation2 + $0x60] sm:$0x1] %vm963, 0.0
        %969 = vst.msk [vmem:[#allocation2 + $0x78] sm:$0x1] %vm963, 0.0
        %970 = vst.msk [vmem:[#allocation2 + $0x90] sm:$0x1] %vm963, 0.0
        %971 = vst.msk [vmem:[#allocation2 + $0xa8] sm:$0x1] %vm963, 0.0
        %972 = vst.msk [vmem:[#allocation2 + $0xc0] sm:$0x1] %vm963, 0.0
        %973 = vst.msk [vmem:[#allocation2 + $0xd8] sm:$0x1] %vm963, 0.0
        %974 = vst.msk [vmem:[#allocation2 + $0x11] sm:$0x1] %vm963, 0.0
        %975 = vst.msk [vmem:[#allocation2 + $0x29] sm:$0x1] %vm963, 0.0
        %976 = vst.msk [vmem:[#allocation2 + $0x41] sm:$0x1] %vm963, 0.0
        %977 = vst.msk [vmem:[#allocation2 + $0x59] sm:$0x1] %vm963, 0.0
        %978 = vst.msk [vmem:[#allocation2 + $0x71] sm:$0x1] %vm963, 0.0
        %979 = vst.msk [vmem:[#allocation2 + $0x89] sm:$0x1] %vm963, 0.0
        %980 = vst.msk [vmem:[#allocation2 + $0xa1] sm:$0x1] %vm963, 0.0
        %981 = vst.msk [vmem:[#allocation2 + $0xb9] sm:$0x1] %vm963, 0.0
        %982 = vst.msk [vmem:[#allocation2 + $0xd1] sm:$0x1] %vm963, 0.0
        %983 = vst.msk [vmem:[#allocation2 + $0xe9] sm:$0x1] %vm963, 0.0
        %v984 = vld [vmem:[#allocation2] sm:$0xff]
        %v985 = vld [vmem:[#allocation2 + $0x8] sm:$0xff]
        %v986 = vld [vmem:[#allocation2 + $0x18] sm:$0xff]
        %v987 = vld [vmem:[#allocation2 + $0x20] sm:$0xff]
        %v988 = vld [vmem:[#allocation2 + $0x30] sm:$0xff]
        %v989 = vld [vmem:[#allocation2 + $0x38] sm:$0xff]
        %v990 = vld [vmem:[#allocation2 + $0x48] sm:$0xff]
        %v991 = vld [vmem:[#allocation2 + $0x50] sm:$0xff]
        %v992 = vld [vmem:[#allocation2 + $0x60] sm:$0xff]
        %v993 = vld [vmem:[#allocation2 + $0x68] sm:$0xff]
        %v994 = vld [vmem:[#allocation2 + $0x78] sm:$0xff]
        %v995 = vld [vmem:[#allocation2 + $0x80] sm:$0xff]
        %v996 = vld [vmem:[#allocation2 + $0x90] sm:$0xff]
        %v997 = vld [vmem:[#allocation2 + $0x98] sm:$0xff]
        %v998 = vld [vmem:[#allocation2 + $0xa8] sm:$0xff]
        %v999 = vld [vmem:[#allocation2 + $0xb0] sm:$0xff]
        %v1000 = vld [vmem:[#allocation2 + $0x1] sm:$0xff]
        %v1001 = vld [vmem:[#allocation2 + $0x9] sm:$0xff]
        %v1002 = vld [vmem:[#allocation2 + $0x19] sm:$0xff]
        %v1003 = vld [vmem:[#allocation2 + $0x21] sm:$0xff]
        %v1004 = vld [vmem:[#allocation2 + $0x31] sm:$0xff]
        %v1005 = vld [vmem:[#allocation2 + $0x39] sm:$0xff]
        %v1006 = vld [vmem:[#allocation2 + $0x49] sm:$0xff]
        %v1007 = vld [vmem:[#allocation2 + $0x51] sm:$0xff]
        %v1008 = vld [vmem:[#allocation2 + $0x61] sm:$0xff]
        %v1009 = vld [vmem:[#allocation2 + $0x69] sm:$0xff]
        %v1010 = vld [vmem:[#allocation2 + $0x79] sm:$0xff]
        %v1011 = vld [vmem:[#allocation2 + $0x81] sm:$0xff]
        %v1012 = vld [vmem:[#allocation2 + $0x91] sm:$0xff]
        %v1013 = vld [vmem:[#allocation2 + $0x99] sm:$0xff]
        %v1014 = vld [vmem:[#allocation2 + $0xa9] sm:$0xff]
        %v1015 = vld [vmem:[#allocation2 + $0xb1] sm:$0xff]
        %v1016 = vld [vmem:[#allocation2 + $0x2] sm:$0xff]
        %v1017 = vld [vmem:[#allocation2 + $0xa] sm:$0xff]
        %v1018 = vld [vmem:[#allocation2 + $0x1a] sm:$0xff]
        %v1019 = vld [vmem:[#allocation2 + $0x22] sm:$0xff]
        %v1020 = vld [vmem:[#allocation2 + $0x32] sm:$0xff]
        %v1021 = vld [vmem:[#allocation2 + $0x3a] sm:$0xff]
        %v1022 = vld [vmem:[#allocation2 + $0x4a] sm:$0xff]
        %v1023 = vld [vmem:[#allocation2 + $0x52] sm:$0xff]
        %v1024 = vld [vmem:[#allocation2 + $0x62] sm:$0xff]
        %v1025 = vld [vmem:[#allocation2 + $0x6a] sm:$0xff]
        %v1026 = vld [vmem:[#allocation2 + $0x7a] sm:$0xff]
        %v1027 = vld [vmem:[#allocation2 + $0x82] sm:$0xff]
        %v1028 = vld [vmem:[#allocation2 + $0x92] sm:$0xff]
        %v1029 = vld [vmem:[#allocation2 + $0x9a] sm:$0xff]
        %v1030 = vld [vmem:[#allocation2 + $0xaa] sm:$0xff]
        %v1031 = vld [vmem:[#allocation2 + $0xb2] sm:$0xff]
        %v1032 = vld [vmem:[%s813] sm:$0xff]
        %v1033 = vld [vmem:[%s813 + $0x8] sm:$0xff]
        %v1034 = vld [vmem:[%s813 + $0x18] sm:$0xff]
        %v1035 = vld [vmem:[%s813 + $0x20] sm:$0xff]
        %v1036 = vld [vmem:[%s813 + $0x30] sm:$0xff]
        %v1037 = vld [vmem:[%s813 + $0x38] sm:$0xff]
        %v1038 = vld [vmem:[%s813 + $0x48] sm:$0xff]
        %v1039 = vld [vmem:[%s813 + $0x50] sm:$0xff]
        %v1040 = vld [vmem:[%s813 + $0x60] sm:$0xff]
        %v1041 = vld [vmem:[%s813 + $0x68] sm:$0xff]
        %v1042 = vld [vmem:[%s813 + $0x78] sm:$0xff]
        %v1043 = vld [vmem:[%s813 + $0x80] sm:$0xff]
        %v1044 = vld [vmem:[%s813 + $0x90] sm:$0xff]
        %v1045 = vld [vmem:[%s813 + $0x98] sm:$0xff]
        %v1046 = vld [vmem:[%s813 + $0xa8] sm:$0xff]
        %v1047 = vld [vmem:[%s813 + $0xb0] sm:$0xff]
        %v1048 = vld [vmem:[%s813 + $0x1] sm:$0xff]
        %v1049 = vld [vmem:[%s813 + $0x9] sm:$0xff]
        %v1050 = vld [vmem:[%s813 + $0x19] sm:$0xff]
        %v1051 = vld [vmem:[%s813 + $0x21] sm:$0xff]
        %v1052 = vld [vmem:[%s813 + $0x31] sm:$0xff]
        %v1053 = vld [vmem:[%s813 + $0x39] sm:$0xff]
        %v1054 = vld [vmem:[%s813 + $0x49] sm:$0xff]
        %v1055 = vld [vmem:[%s813 + $0x51] sm:$0xff]
        %v1056 = vld [vmem:[%s813 + $0x61] sm:$0xff]
        %v1057 = vld [vmem:[%s813 + $0x69] sm:$0xff]
        %v1058 = vld [vmem:[%s813 + $0x79] sm:$0xff]
        %v1059 = vld [vmem:[%s813 + $0x81] sm:$0xff]
        %v1060 = vld [vmem:[%s813 + $0x91] sm:$0xff]
        %v1061 = vld [vmem:[%s813 + $0x99] sm:$0xff]
        %v1062 = vld [vmem:[%s813 + $0xa9] sm:$0xff]
        %v1063 = vld [vmem:[%s813 + $0xb1] sm:$0xff]
        %v1064 = vld [vmem:[%s813 + $0x2] sm:$0xff]
        %v1065 = vld [vmem:[%s813 + $0xa] sm:$0xff]
        %v1066 = vld [vmem:[%s813 + $0x1a] sm:$0xff]
        %v1067 = vld [vmem:[%s813 + $0x22] sm:$0xff]
        %v1068 = vld [vmem:[%s813 + $0x32] sm:$0xff]
        %v1069 = vld [vmem:[%s813 + $0x3a] sm:$0xff]
        %v1070 = vld [vmem:[%s813 + $0x4a] sm:$0xff]
        %v1071 = vld [vmem:[%s813 + $0x52] sm:$0xff]
        %v1072 = vld [vmem:[%s813 + $0x62] sm:$0xff]
        %v1073 = vld [vmem:[%s813 + $0x6a] sm:$0xff]
        %v1074 = vld [vmem:[%s813 + $0x7a] sm:$0xff]
        %v1075 = vld [vmem:[%s813 + $0x82] sm:$0xff]
        %v1076 = vld [vmem:[%s813 + $0x92] sm:$0xff]
        %v1077 = vld [vmem:[%s813 + $0x9a] sm:$0xff]
        %v1078 = vld [vmem:[%s813 + $0xaa] sm:$0xff]
        %v1079 = vld [vmem:[%s813 + $0xb2] sm:$0xff]
        %s1080 = scalar_lea.vmem [#allocation2], 48
        %v1081 = vld [vmem:[%s1080] sm:$0xff]
        %v1082 = vld [vmem:[%s1080 + $0x8] sm:$0xff]
        %v1083 = vld [vmem:[%s1080 + $0x18] sm:$0xff]
        %v1084 = vld [vmem:[%s1080 + $0x20] sm:$0xff]
        %v1085 = vld [vmem:[%s1080 + $0x30] sm:$0xff]
        %v1086 = vld [vmem:[%s1080 + $0x38] sm:$0xff]
        %v1087 = vld [vmem:[%s1080 + $0x48] sm:$0xff]
        %v1088 = vld [vmem:[%s1080 + $0x50] sm:$0xff]
        %v1089 = vld [vmem:[%s1080 + $0x60] sm:$0xff]
        %v1090 = vld [vmem:[%s1080 + $0x68] sm:$0xff]
        %v1091 = vld [vmem:[%s1080 + $0x78] sm:$0xff]
        %v1092 = vld [vmem:[%s1080 + $0x80] sm:$0xff]
        %v1093 = vld [vmem:[%s1080 + $0x90] sm:$0xff]
        %v1094 = vld [vmem:[%s1080 + $0x98] sm:$0xff]
        %v1095 = vld [vmem:[%s1080 + $0xa8] sm:$0xff]
        %v1096 = vld [vmem:[%s1080 + $0xb0] sm:$0xff]
        %v1097 = vld [vmem:[%s1080 + $0x1] sm:$0xff]
        %v1098 = vld [vmem:[%s1080 + $0x9] sm:$0xff]
        %v1099 = vld [vmem:[%s1080 + $0x19] sm:$0xff]
        %v1100 = vld [vmem:[%s1080 + $0x21] sm:$0xff]
        %v1101 = vld [vmem:[%s1080 + $0x31] sm:$0xff]
        %v1102 = vld [vmem:[%s1080 + $0x39] sm:$0xff]
        %v1103 = vld [vmem:[%s1080 + $0x49] sm:$0xff]
        %v1104 = vld [vmem:[%s1080 + $0x51] sm:$0xff]
        %v1105 = vld [vmem:[%s1080 + $0x61] sm:$0xff]
        %v1106 = vld [vmem:[%s1080 + $0x69] sm:$0xff]
        %v1107 = vld [vmem:[%s1080 + $0x79] sm:$0xff]
        %v1108 = vld [vmem:[%s1080 + $0x81] sm:$0xff]
        %v1109 = vld [vmem:[%s1080 + $0x91] sm:$0xff]
        %v1110 = vld [vmem:[%s1080 + $0x99] sm:$0xff]
        %v1111 = vld [vmem:[%s1080 + $0xa9] sm:$0xff]
        %v1112 = vld [vmem:[%s1080 + $0xb1] sm:$0xff]
        %v1113 = vld [vmem:[%s1080 + $0x2] sm:$0xff]
        %v1114 = vld [vmem:[%s1080 + $0xa] sm:$0xff]
        %v1115 = vld [vmem:[%s1080 + $0x1a] sm:$0xff]
        %v1116 = vld [vmem:[%s1080 + $0x22] sm:$0xff]
        %v1117 = vld [vmem:[%s1080 + $0x32] sm:$0xff]
        %v1118 = vld [vmem:[%s1080 + $0x3a] sm:$0xff]
        %v1119 = vld [vmem:[%s1080 + $0x4a] sm:$0xff]
        %v1120 = vld [vmem:[%s1080 + $0x52] sm:$0xff]
        %v1121 = vld [vmem:[%s1080 + $0x62] sm:$0xff]
        %v1122 = vld [vmem:[%s1080 + $0x6a] sm:$0xff]
        %v1123 = vld [vmem:[%s1080 + $0x7a] sm:$0xff]
        %v1124 = vld [vmem:[%s1080 + $0x82] sm:$0xff]
        %v1125 = vld [vmem:[%s1080 + $0x92] sm:$0xff]
        %v1126 = vld [vmem:[%s1080 + $0x9a] sm:$0xff]
        %v1127 = vld [vmem:[%s1080 + $0xaa] sm:$0xff]
        %v1128 = vld [vmem:[%s1080 + $0xb2] sm:$0xff]
        %1145 = vrot.lane.b32.xlu0 %v1000, 4
        %v1146 = vpop.permute.xlu0 %1145
        %1147 = vrot.lane.b32.xlu0 %v1001, 4
        %v1148 = vpop.permute.xlu0 %1147
        %1149 = vrot.lane.b32.xlu0 %v1002, 4
        %v1150 = vpop.permute.xlu0 %1149
        %1151 = vrot.lane.b32.xlu0 %v1003, 4
        %v1152 = vpop.permute.xlu0 %1151
        %1153 = vrot.lane.b32.xlu0 %v1004, 4
        %v1154 = vpop.permute.xlu0 %1153
        %1155 = vrot.lane.b32.xlu0 %v1005, 4
        %v1156 = vpop.permute.xlu0 %1155
        %1157 = vrot.lane.b32.xlu0 %v1006, 4
        %v1158 = vpop.permute.xlu0 %1157
        %1159 = vrot.lane.b32.xlu0 %v1007, 4
        %v1160 = vpop.permute.xlu0 %1159
        %1161 = vrot.lane.b32.xlu0 %v1008, 4
        %v1162 = vpop.permute.xlu0 %1161
        %1163 = vrot.lane.b32.xlu0 %v1009, 4
        %v1164 = vpop.permute.xlu0 %1163
        %1165 = vrot.lane.b32.xlu0 %v1010, 4
        %v1166 = vpop.permute.xlu0 %1165
        %1167 = vrot.lane.b32.xlu0 %v1011, 4
        %v1168 = vpop.permute.xlu0 %1167
        %1169 = vrot.lane.b32.xlu0 %v1012, 4
        %v1170 = vpop.permute.xlu0 %1169
        %1171 = vrot.lane.b32.xlu0 %v1013, 4
        %v1172 = vpop.permute.xlu0 %1171
        %1173 = vrot.lane.b32.xlu0 %v1014, 4
        %v1174 = vpop.permute.xlu0 %1173
        %1175 = vrot.lane.b32.xlu0 %v1015, 4
        %v1176 = vpop.permute.xlu0 %1175
        %1209 = vrot.lane.b32.xlu0 %v1016, 8
        %v1210 = vpop.permute.xlu0 %1209
        %1211 = vrot.lane.b32.xlu0 %v1017, 8
        %v1212 = vpop.permute.xlu0 %1211
        %1213 = vrot.lane.b32.xlu0 %v1018, 8
        %v1214 = vpop.permute.xlu0 %1213
        %1215 = vrot.lane.b32.xlu0 %v1019, 8
        %v1216 = vpop.permute.xlu0 %1215
        %1217 = vrot.lane.b32.xlu0 %v1020, 8
        %v1218 = vpop.permute.xlu0 %1217
        %1219 = vrot.lane.b32.xlu0 %v1021, 8
        %v1220 = vpop.permute.xlu0 %1219
        %1221 = vrot.lane.b32.xlu0 %v1022, 8
        %v1222 = vpop.permute.xlu0 %1221
        %1223 = vrot.lane.b32.xlu0 %v1023, 8
        %v1224 = vpop.permute.xlu0 %1223
        %1225 = vrot.lane.b32.xlu0 %v1024, 8
        %v1226 = vpop.permute.xlu0 %1225
        %1227 = vrot.lane.b32.xlu0 %v1025, 8
        %v1228 = vpop.permute.xlu0 %1227
        %1229 = vrot.lane.b32.xlu0 %v1026, 8
        %v1230 = vpop.permute.xlu0 %1229
        %1231 = vrot.lane.b32.xlu0 %v1027, 8
        %v1232 = vpop.permute.xlu0 %1231
        %1233 = vrot.lane.b32.xlu0 %v1028, 8
        %v1234 = vpop.permute.xlu0 %1233
        %1235 = vrot.lane.b32.xlu0 %v1029, 8
        %v1236 = vpop.permute.xlu0 %1235
        %1237 = vrot.lane.b32.xlu0 %v1030, 8
        %v1238 = vpop.permute.xlu0 %1237
        %1239 = vrot.lane.b32.xlu0 %v1031, 8
        %v1240 = vpop.permute.xlu0 %1239
        %1273 = vrot.lane.b32.xlu0 %v1032, 12
        %v1274 = vpop.permute.xlu0 %1273
        %1275 = vrot.lane.b32.xlu0 %v1033, 12
        %v1276 = vpop.permute.xlu0 %1275
        %1277 = vrot.lane.b32.xlu0 %v1034, 12
        %v1278 = vpop.permute.xlu0 %1277
        %1279 = vrot.lane.b32.xlu0 %v1035, 12
        %v1280 = vpop.permute.xlu0 %1279
        %1281 = vrot.lane.b32.xlu0 %v1036, 12
        %v1282 = vpop.permute.xlu0 %1281
        %1283 = vrot.lane.b32.xlu0 %v1037, 12
        %v1284 = vpop.permute.xlu0 %1283
        %1285 = vrot.lane.b32.xlu0 %v1038, 12
        %v1286 = vpop.permute.xlu0 %1285
        %1287 = vrot.lane.b32.xlu0 %v1039, 12
        %v1288 = vpop.permute.xlu0 %1287
        %1289 = vrot.lane.b32.xlu0 %v1040, 12
        %v1290 = vpop.permute.xlu0 %1289
        %1291 = vrot.lane.b32.xlu0 %v1041, 12
        %v1292 = vpop.permute.xlu0 %1291
        %1293 = vrot.lane.b32.xlu0 %v1042, 12
        %v1294 = vpop.permute.xlu0 %1293
        %1295 = vrot.lane.b32.xlu0 %v1043, 12
        %v1296 = vpop.permute.xlu0 %1295
        %1297 = vrot.lane.b32.xlu0 %v1044, 12
        %v1298 = vpop.permute.xlu0 %1297
        %1299 = vrot.lane.b32.xlu0 %v1045, 12
        %v1300 = vpop.permute.xlu0 %1299
        %1301 = vrot.lane.b32.xlu0 %v1046, 12
        %v1302 = vpop.permute.xlu0 %1301
        %1303 = vrot.lane.b32.xlu0 %v1047, 12
        %v1304 = vpop.permute.xlu0 %1303
        %1337 = vrot.lane.b32.xlu0 %v1048, 16
        %v1338 = vpop.permute.xlu0 %1337
        %1339 = vrot.lane.b32.xlu0 %v1049, 16
        %v1340 = vpop.permute.xlu0 %1339
        %1341 = vrot.lane.b32.xlu0 %v1050, 16
        %v1342 = vpop.permute.xlu0 %1341
        %1343 = vrot.lane.b32.xlu0 %v1051, 16
        %v1344 = vpop.permute.xlu0 %1343
        %1345 = vrot.lane.b32.xlu0 %v1052, 16
        %v1346 = vpop.permute.xlu0 %1345
        %1347 = vrot.lane.b32.xlu0 %v1053, 16
        %v1348 = vpop.permute.xlu0 %1347
        %1349 = vrot.lane.b32.xlu0 %v1054, 16
        %v1350 = vpop.permute.xlu0 %1349
        %1351 = vrot.lane.b32.xlu0 %v1055, 16
        %v1352 = vpop.permute.xlu0 %1351
        %1353 = vrot.lane.b32.xlu0 %v1056, 16
        %v1354 = vpop.permute.xlu0 %1353
        %1355 = vrot.lane.b32.xlu0 %v1057, 16
        %v1356 = vpop.permute.xlu0 %1355
        %1357 = vrot.lane.b32.xlu0 %v1058, 16
        %v1358 = vpop.permute.xlu0 %1357
        %1359 = vrot.lane.b32.xlu0 %v1059, 16
        %v1360 = vpop.permute.xlu0 %1359
        %1361 = vrot.lane.b32.xlu0 %v1060, 16
        %v1362 = vpop.permute.xlu0 %1361
        %1363 = vrot.lane.b32.xlu0 %v1061, 16
        %v1364 = vpop.permute.xlu0 %1363
        %1365 = vrot.lane.b32.xlu0 %v1062, 16
        %v1366 = vpop.permute.xlu0 %1365
        %1367 = vrot.lane.b32.xlu0 %v1063, 16
        %v1368 = vpop.permute.xlu0 %1367
        %1401 = vrot.lane.b32.xlu0 %v1064, 20
        %v1402 = vpop.permute.xlu0 %1401
        %1403 = vrot.lane.b32.xlu0 %v1065, 20
        %v1404 = vpop.permute.xlu0 %1403
        %1405 = vrot.lane.b32.xlu0 %v1066, 20
        %v1406 = vpop.permute.xlu0 %1405
        %1407 = vrot.lane.b32.xlu0 %v1067, 20
        %v1408 = vpop.permute.xlu0 %1407
        %1409 = vrot.lane.b32.xlu0 %v1068, 20
        %v1410 = vpop.permute.xlu0 %1409
        %1411 = vrot.lane.b32.xlu0 %v1069, 20
        %v1412 = vpop.permute.xlu0 %1411
        %1413 = vrot.lane.b32.xlu0 %v1070, 20
        %v1414 = vpop.permute.xlu0 %1413
        %1415 = vrot.lane.b32.xlu0 %v1071, 20
        %v1416 = vpop.permute.xlu0 %1415
        %1417 = vrot.lane.b32.xlu0 %v1072, 20
        %v1418 = vpop.permute.xlu0 %1417
        %1419 = vrot.lane.b32.xlu0 %v1073, 20
        %v1420 = vpop.permute.xlu0 %1419
        %1421 = vrot.lane.b32.xlu0 %v1074, 20
        %v1422 = vpop.permute.xlu0 %1421
        %1423 = vrot.lane.b32.xlu0 %v1075, 20
        %v1424 = vpop.permute.xlu0 %1423
        %1425 = vrot.lane.b32.xlu0 %v1076, 20
        %v1426 = vpop.permute.xlu0 %1425
        %1427 = vrot.lane.b32.xlu0 %v1077, 20
        %v1428 = vpop.permute.xlu0 %1427
        %1429 = vrot.lane.b32.xlu0 %v1078, 20
        %v1430 = vpop.permute.xlu0 %1429
        %1431 = vrot.lane.b32.xlu0 %v1079, 20
        %v1432 = vpop.permute.xlu0 %1431
        %1465 = vrot.lane.b32.xlu0 %v1081, 24
        %v1466 = vpop.permute.xlu0 %1465
        %1467 = vrot.lane.b32.xlu0 %v1082, 24
        %v1468 = vpop.permute.xlu0 %1467
        %1469 = vrot.lane.b32.xlu0 %v1083, 24
        %v1470 = vpop.permute.xlu0 %1469
        %1471 = vrot.lane.b32.xlu0 %v1084, 24
        %v1472 = vpop.permute.xlu0 %1471
        %1473 = vrot.lane.b32.xlu0 %v1085, 24
        %v1474 = vpop.permute.xlu0 %1473
        %1475 = vrot.lane.b32.xlu0 %v1086, 24
        %v1476 = vpop.permute.xlu0 %1475
        %1477 = vrot.lane.b32.xlu0 %v1087, 24
        %v1478 = vpop.permute.xlu0 %1477
        %1479 = vrot.lane.b32.xlu0 %v1088, 24
        %v1480 = vpop.permute.xlu0 %1479
        %1481 = vrot.lane.b32.xlu0 %v1089, 24
        %v1482 = vpop.permute.xlu0 %1481
        %1483 = vrot.lane.b32.xlu0 %v1090, 24
        %v1484 = vpop.permute.xlu0 %1483
        %1485 = vrot.lane.b32.xlu0 %v1091, 24
        %v1486 = vpop.permute.xlu0 %1485
        %1487 = vrot.lane.b32.xlu0 %v1092, 24
        %v1488 = vpop.permute.xlu0 %1487
        %1489 = vrot.lane.b32.xlu0 %v1093, 24
        %v1490 = vpop.permute.xlu0 %1489
        %1491 = vrot.lane.b32.xlu0 %v1094, 24
        %v1492 = vpop.permute.xlu0 %1491
        %1493 = vrot.lane.b32.xlu0 %v1095, 24
        %v1494 = vpop.permute.xlu0 %1493
        %1495 = vrot.lane.b32.xlu0 %v1096, 24
        %v1496 = vpop.permute.xlu0 %1495
        %1529 = vrot.lane.b32.xlu0 %v1097, 28
        %v1530 = vpop.permute.xlu0 %1529
        %1531 = vrot.lane.b32.xlu0 %v1098, 28
        %v1532 = vpop.permute.xlu0 %1531
        %1533 = vrot.lane.b32.xlu0 %v1099, 28
        %v1534 = vpop.permute.xlu0 %1533
        %1535 = vrot.lane.b32.xlu0 %v1100, 28
        %v1536 = vpop.permute.xlu0 %1535
        %1537 = vrot.lane.b32.xlu0 %v1101, 28
        %v1538 = vpop.permute.xlu0 %1537
        %1539 = vrot.lane.b32.xlu0 %v1102, 28
        %v1540 = vpop.permute.xlu0 %1539
        %1541 = vrot.lane.b32.xlu0 %v1103, 28
        %v1542 = vpop.permute.xlu0 %1541
        %1543 = vrot.lane.b32.xlu0 %v1104, 28
        %v1544 = vpop.permute.xlu0 %1543
        %1545 = vrot.lane.b32.xlu0 %v1105, 28
        %v1546 = vpop.permute.xlu0 %1545
        %1547 = vrot.lane.b32.xlu0 %v1106, 28
        %v1548 = vpop.permute.xlu0 %1547
        %1549 = vrot.lane.b32.xlu0 %v1107, 28
        %v1550 = vpop.permute.xlu0 %1549
        %1551 = vrot.lane.b32.xlu0 %v1108, 28
        %v1552 = vpop.permute.xlu0 %1551
        %1553 = vrot.lane.b32.xlu0 %v1109, 28
        %v1554 = vpop.permute.xlu0 %1553
        %1555 = vrot.lane.b32.xlu0 %v1110, 28
        %v1556 = vpop.permute.xlu0 %1555
        %1557 = vrot.lane.b32.xlu0 %v1111, 28
        %v1558 = vpop.permute.xlu0 %1557
        %1559 = vrot.lane.b32.xlu0 %v1112, 28
        %v1560 = vpop.permute.xlu0 %1559
        %1593 = vrot.lane.b32.xlu0 %v1113, 32
        %v1594 = vpop.permute.xlu0 %1593
        %1595 = vrot.lane.b32.xlu0 %v1114, 32
        %v1596 = vpop.permute.xlu0 %1595
        %1597 = vrot.lane.b32.xlu0 %v1115, 32
        %v1598 = vpop.permute.xlu0 %1597
        %1599 = vrot.lane.b32.xlu0 %v1116, 32
        %v1600 = vpop.permute.xlu0 %1599
        %1601 = vrot.lane.b32.xlu0 %v1117, 32
        %v1602 = vpop.permute.xlu0 %1601
        %1603 = vrot.lane.b32.xlu0 %v1118, 32
        %v1604 = vpop.permute.xlu0 %1603
        %1605 = vrot.lane.b32.xlu0 %v1119, 32
        %v1606 = vpop.permute.xlu0 %1605
        %1607 = vrot.lane.b32.xlu0 %v1120, 32
        %v1608 = vpop.permute.xlu0 %1607
        %1609 = vrot.lane.b32.xlu0 %v1121, 32
        %v1610 = vpop.permute.xlu0 %1609
        %1611 = vrot.lane.b32.xlu0 %v1122, 32
        %v1612 = vpop.permute.xlu0 %1611
        %1613 = vrot.lane.b32.xlu0 %v1123, 32
        %v1614 = vpop.permute.xlu0 %1613
        %1615 = vrot.lane.b32.xlu0 %v1124, 32
        %v1616 = vpop.permute.xlu0 %1615
        %1617 = vrot.lane.b32.xlu0 %v1125, 32
        %v1618 = vpop.permute.xlu0 %1617
        %1619 = vrot.lane.b32.xlu0 %v1126, 32
        %v1620 = vpop.permute.xlu0 %1619
        %1621 = vrot.lane.b32.xlu0 %v1127, 32
        %v1622 = vpop.permute.xlu0 %1621
        %1623 = vrot.lane.b32.xlu0 %v1128, 32
        %v1624 = vpop.permute.xlu0 %1623
        %v1641 = vsel %vm814, %v984, %v1146
        %v1642 = vsel %vm814, %v985, %v1148
        %v1643 = vsel %vm814, %v986, %v1150
        %v1644 = vsel %vm814, %v987, %v1152
        %v1645 = vsel %vm814, %v988, %v1154
        %v1646 = vsel %vm814, %v989, %v1156
        %v1647 = vsel %vm814, %v990, %v1158
        %v1648 = vsel %vm814, %v991, %v1160
        %v1649 = vsel %vm814, %v992, %v1162
        %v1650 = vsel %vm814, %v993, %v1164
        %v1651 = vsel %vm814, %v994, %v1166
        %v1652 = vsel %vm814, %v995, %v1168
        %v1653 = vsel %vm814, %v996, %v1170
        %v1654 = vsel %vm814, %v997, %v1172
        %v1655 = vsel %vm814, %v998, %v1174
        %v1656 = vsel %vm814, %v999, %v1176
        %vm1657 = vcmask 64512
        %v1658 = vsel %vm1657, %v1641, %v1210
        %v1659 = vsel %vm1657, %v1642, %v1212
        %v1660 = vsel %vm1657, %v1643, %v1214
        %v1661 = vsel %vm1657, %v1644, %v1216
        %v1662 = vsel %vm1657, %v1645, %v1218
        %v1663 = vsel %vm1657, %v1646, %v1220
        %v1664 = vsel %vm1657, %v1647, %v1222
        %v1665 = vsel %vm1657, %v1648, %v1224
        %v1666 = vsel %vm1657, %v1649, %v1226
        %v1667 = vsel %vm1657, %v1650, %v1228
        %v1668 = vsel %vm1657, %v1651, %v1230
        %v1669 = vsel %vm1657, %v1652, %v1232
        %v1670 = vsel %vm1657, %v1653, %v1234
        %v1671 = vsel %vm1657, %v1654, %v1236
        %v1672 = vsel %vm1657, %v1655, %v1238
        %v1673 = vsel %vm1657, %v1656, %v1240
        %vm1674 = vcmask 97280
        %v1675 = vsel %vm1674, %v1658, %v1274
        %v1676 = vsel %vm1674, %v1659, %v1276
        %v1677 = vsel %vm1674, %v1660, %v1278
        %v1678 = vsel %vm1674, %v1661, %v1280
        %v1679 = vsel %vm1674, %v1662, %v1282
        %v1680 = vsel %vm1674, %v1663, %v1284
        %v1681 = vsel %vm1674, %v1664, %v1286
        %v1682 = vsel %vm1674, %v1665, %v1288
        %v1683 = vsel %vm1674, %v1666, %v1290
        %v1684 = vsel %vm1674, %v1667, %v1292
        %v1685 = vsel %vm1674, %v1668, %v1294
        %v1686 = vsel %vm1674, %v1669, %v1296
        %v1687 = vsel %vm1674, %v1670, %v1298
        %v1688 = vsel %vm1674, %v1671, %v1300
        %v1689 = vsel %vm1674, %v1672, %v1302
        %v1690 = vsel %vm1674, %v1673, %v1304
        %v1691 = vsel %vm603, %v1675, %v1338
        %v1692 = vsel %vm603, %v1676, %v1340
        %v1693 = vsel %vm603, %v1677, %v1342
        %v1694 = vsel %vm603, %v1678, %v1344
        %v1695 = vsel %vm603, %v1679, %v1346
        %v1696 = vsel %vm603, %v1680, %v1348
        %v1697 = vsel %vm603, %v1681, %v1350
        %v1698 = vsel %vm603, %v1682, %v1352
        %v1699 = vsel %vm603, %v1683, %v1354
        %v1700 = vsel %vm603, %v1684, %v1356
        %v1701 = vsel %vm603, %v1685, %v1358
        %v1702 = vsel %vm603, %v1686, %v1360
        %v1703 = vsel %vm603, %v1687, %v1362
        %v1704 = vsel %vm603, %v1688, %v1364
        %v1705 = vsel %vm603, %v1689, %v1366
        %v1706 = vsel %vm603, %v1690, %v1368
        %vm1707 = vcmask 162816
        %v1708 = vsel %vm1707, %v1691, %v1402
        %v1709 = vsel %vm1707, %v1692, %v1404
        %v1710 = vsel %vm1707, %v1693, %v1406
        %v1711 = vsel %vm1707, %v1694, %v1408
        %v1712 = vsel %vm1707, %v1695, %v1410
        %v1713 = vsel %vm1707, %v1696, %v1412
        %v1714 = vsel %vm1707, %v1697, %v1414
        %v1715 = vsel %vm1707, %v1698, %v1416
        %v1716 = vsel %vm1707, %v1699, %v1418
        %v1717 = vsel %vm1707, %v1700, %v1420
        %v1718 = vsel %vm1707, %v1701, %v1422
        %v1719 = vsel %vm1707, %v1702, %v1424
        %v1720 = vsel %vm1707, %v1703, %v1426
        %v1721 = vsel %vm1707, %v1704, %v1428
        %v1722 = vsel %vm1707, %v1705, %v1430
        %v1723 = vsel %vm1707, %v1706, %v1432
        %vm1724 = vcmask 195584
        %v1725 = vsel %vm1724, %v1708, %v1466
        %v1726 = vsel %vm1724, %v1709, %v1468
        %v1727 = vsel %vm1724, %v1710, %v1470
        %v1728 = vsel %vm1724, %v1711, %v1472
        %v1729 = vsel %vm1724, %v1712, %v1474
        %v1730 = vsel %vm1724, %v1713, %v1476
        %v1731 = vsel %vm1724, %v1714, %v1478
        %v1732 = vsel %vm1724, %v1715, %v1480
        %v1733 = vsel %vm1724, %v1716, %v1482
        %v1734 = vsel %vm1724, %v1717, %v1484
        %v1735 = vsel %vm1724, %v1718, %v1486
        %v1736 = vsel %vm1724, %v1719, %v1488
        %v1737 = vsel %vm1724, %v1720, %v1490
        %v1738 = vsel %vm1724, %v1721, %v1492
        %v1739 = vsel %vm1724, %v1722, %v1494
        %v1740 = vsel %vm1724, %v1723, %v1496
        %vm1741 = vcmask 228352
        %v1742 = vsel %vm1741, %v1725, %v1530
        %v1743 = vsel %vm1741, %v1726, %v1532
        %v1744 = vsel %vm1741, %v1727, %v1534
        %v1745 = vsel %vm1741, %v1728, %v1536
        %v1746 = vsel %vm1741, %v1729, %v1538
        %v1747 = vsel %vm1741, %v1730, %v1540
        %v1748 = vsel %vm1741, %v1731, %v1542
        %v1749 = vsel %vm1741, %v1732, %v1544
        %v1750 = vsel %vm1741, %v1733, %v1546
        %v1751 = vsel %vm1741, %v1734, %v1548
        %v1752 = vsel %vm1741, %v1735, %v1550
        %v1753 = vsel %vm1741, %v1736, %v1552
        %v1754 = vsel %vm1741, %v1737, %v1554
        %v1755 = vsel %vm1741, %v1738, %v1556
        %v1756 = vsel %vm1741, %v1739, %v1558
        %v1757 = vsel %vm1741, %v1740, %v1560
        %vm1758 = vcmask 261120
        %v1759 = vsel %vm1758, %v1742, %v1594
        %v1760 = vsel %vm1758, %v1743, %v1596
        %v1761 = vsel %vm1758, %v1744, %v1598
        %v1762 = vsel %vm1758, %v1745, %v1600
        %v1763 = vsel %vm1758, %v1746, %v1602
        %v1764 = vsel %vm1758, %v1747, %v1604
        %v1765 = vsel %vm1758, %v1748, %v1606
        %v1766 = vsel %vm1758, %v1749, %v1608
        %v1767 = vsel %vm1758, %v1750, %v1610
        %v1768 = vsel %vm1758, %v1751, %v1612
        %v1769 = vsel %vm1758, %v1752, %v1614
        %v1770 = vsel %vm1758, %v1753, %v1616
        %v1771 = vsel %vm1758, %v1754, %v1618
        %v1772 = vsel %vm1758, %v1755, %v1620
        %v1773 = vsel %vm1758, %v1756, %v1622
        %v1774 = vsel %vm1758, %v1757, %v1624
        %v1775 = vld [vmem:[%s4] sm:$0xff]
        %v1776 = vld [vmem:[%s4 + $0x8] sm:$0xff]
        %v1777 = vld [vmem:[%s4 + $0x10] sm:$0xff]
        %v1778 = vld [vmem:[%s4 + $0x18] sm:$0xff]
        %v1779 = vld [vmem:[%s4 + $0x20] sm:$0xf]
        %v1780 = vld [vmem:[%s9] sm:$0x1]
        %v1782 = vlaneseq
        %v1783 = vshrl.u32 %v1782, 7
        %v1784 = vsub.s32 0, %v1783
        %v1785 = vrot.slane %v1780, %v1784
        %vm1787 = vcmask 293888
        %v1789 = vsel %vm1787, %v1759, 0
        %v1792 = vsel %vm1787, %v1760, 0
        %v1795 = vsel %vm1787, %v1761, 0
        %v1798 = vsel %vm1787, %v1762, 0
        %v1801 = vsel %vm1787, %v1763, 0
        %v1804 = vsel %vm1787, %v1764, 0
        %v1807 = vsel %vm1787, %v1765, 0
        %v1810 = vsel %vm1787, %v1766, 0
        %v1813 = vsel %vm1787, %v1767, 0
        %v1816 = vsel %vm1787, %v1768, 0
        %v1819 = vsel %vm1787, %v1769, 0
        %v1822 = vsel %vm1787, %v1770, 0
        %v1825 = vsel %vm1787, %v1771, 0
        %v1828 = vsel %vm1787, %v1772, 0
        %v1831 = vsel %vm1787, %v1773, 0
        %v1834 = vsel %vm1787, %v1774, 0
        %vm1836 = vcmask 1043456
        %v1838 = vsel %vm1836, %v1779, 0
        %1840 = vmatprep.subr.mxu0 0.0
        %1841 = vmatpush1.msra.mxu0 %v1775
        %1842 = vmatprep.subr.mxu0 0.0
        %1843 = vmatpush1.msra.mxu0 %v1776
        %1844 = vmatprep.subr.mxu0 0.0
        %1845 = vmatpush1.msra.mxu0 %v1777
        %1846 = vmatprep.subr.mxu0 0.0
        %1847 = vmatpush1.msra.mxu0 %v1778
        %1848 = vmatprep.subr.mxu0 0.0
        %1849 = vmatpush1.msra.mxu0 %v1838
        %1850 = vmatprep.subr.mxu0 0.0
        %1851 = vmatpush1.msra.mxu0 0.0
        %1852 = vmatprep.subr.mxu0 0.0
        %1853 = vmatpush1.msra.mxu0 0.0
        %1854 = vmatprep.subr.mxu0 0.0
        %1855 = vmatpush1.msra.mxu0 0.0
        %1856 = vmatprep.subr.mxu0 0.0
        %1857 = vmatpush1.msra.mxu0 0.0
        %1858 = vmatprep.subr.mxu0 0.0
        %1859 = vmatpush1.msra.mxu0 0.0
        %1860 = vmatprep.subr.mxu0 0.0
        %1861 = vmatpush1.msra.mxu0 0.0
        %1862 = vmatprep.subr.mxu0 0.0
        %1863 = vmatpush1.msra.mxu0 0.0
        %1864 = vmatprep.subr.mxu0 0.0
        %1865 = vmatpush1.msra.mxu0 0.0
        %1866 = vmatprep.subr.mxu0 0.0
        %1867 = vmatpush1.msra.mxu0 0.0
        %1868 = vmatprep.subr.mxu0 0.0
        %1869 = vmatpush1.msra.mxu0 0.0
        %1870 = vmatprep.subr.mxu0 0.0
        %1871 = vmatpush1.msra.mxu0 0.0
        %1872 = vmatprep.subr.mxu0 0.0
        %1873 = vmatpush1.msra.mxu0 0.0
        %1874 = vmatprep.subr.mxu0 0.0
        %1875 = vmatpush1.msra.mxu0 0.0
        %1876 = vmatprep.subr.mxu0 0.0
        %1877 = vmatpush1.msra.mxu0 0.0
        %1878 = vmatprep.subr.mxu0 0.0
        %1879 = vmatpush1.msra.mxu0 0.0
        %1880 = vmatprep.subr.mxu0 0.0
        %1881 = vmatpush1.msra.mxu0 0.0
        %1882 = vmatprep.subr.mxu0 0.0
        %1883 = vmatpush1.msra.mxu0 0.0
        %1884 = vmatprep.subr.mxu0 0.0
        %1885 = vmatpush1.msra.mxu0 0.0
        %1886 = vmatprep.subr.mxu0 0.0
        %1887 = vmatpush1.msra.mxu0 0.0
        %1888 = vmatprep.subr.mxu0 0.0
        %1889 = vmatpush1.msra.mxu0 0.0
        %1890 = vmatprep.subr.mxu0 0.0
        %1891 = vmatpush1.msra.mxu0 0.0
        %1892 = vmatprep.subr.mxu0 0.0
        %1893 = vmatpush1.msra.mxu0 0.0
        %1894 = vmatprep.subr.mxu0 0.0
        %1895 = vmatpush1.msra.mxu0 0.0
        %1896 = vmatprep.subr.mxu0 0.0
        %1897 = vmatpush1.msra.mxu0 0.0
        %1898 = vmatprep.subr.mxu0 0.0
        %1899 = vmatpush1.msra.mxu0 0.0
        %1900 = vmatprep.subr.mxu0 0.0
        %1901 = vmatpush1.msra.mxu0 0.0
        %1902 = vmatprep.subr.mxu0 0.0
        %1903 = vmatpush1.msra.mxu0 0.0
        %1904 = vmatprep.mubr.f32.mxu0 0.0
        %1905 = vmatmul.mubr.f32.gmra.mrb[0].mxu0 %v1789
        %v1906 = vpop.f32.mrb[0].mxu0
        %v1907 = vadd.f32 %v1785, %v1906
        %v1908 = vpop.f32.mrb[0].mxu0
        %1909 = vmatprep.mubr.f32.mxu0 0.0
        %1910 = vmatmul.mubr.f32.gmra.mrb[0].mxu0 %v1792
        %v1911 = vpop.f32.mrb[0].mxu0
        %v1912 = vadd.f32 %v1785, %v1911
        %v1913 = vpop.f32.mrb[0].mxu0
        %1914 = vmatprep.mubr.f32.mxu0 0.0
        %1915 = vmatmul.mubr.f32.gmra.mrb[0].mxu0 %v1795
        %v1916 = vpop.f32.mrb[0].mxu0
        %v1917 = vadd.f32 %v1785, %v1916
        %v1918 = vpop.f32.mrb[0].mxu0
        %1919 = vmatprep.mubr.f32.mxu0 0.0
        %1920 = vmatmul.mubr.f32.gmra.mrb[0].mxu0 %v1798
        %v1921 = vpop.f32.mrb[0].mxu0
        %v1922 = vadd.f32 %v1785, %v1921
        %v1923 = vpop.f32.mrb[0].mxu0
        %1924 = vmatprep.mubr.f32.mxu0 0.0
        %1925 = vmatmul.mubr.f32.gmra.mrb[0].mxu0 %v1801
        %v1926 = vpop.f32.mrb[0].mxu0
        %v1927 = vadd.f32 %v1785, %v1926
        %v1928 = vpop.f32.mrb[0].mxu0
        %1929 = vmatprep.mubr.f32.mxu0 0.0
        %1930 = vmatmul.mubr.f32.gmra.mrb[0].mxu0 %v1804
        %v1931 = vpop.f32.mrb[0].mxu0
        %v1932 = vadd.f32 %v1785, %v1931
        %v1933 = vpop.f32.mrb[0].mxu0
        %1934 = vmatprep.mubr.f32.mxu0 0.0
        %1935 = vmatmul.mubr.f32.gmra.mrb[0].mxu0 %v1807
        %v1936 = vpop.f32.mrb[0].mxu0
        %v1937 = vadd.f32 %v1785, %v1936
        %v1938 = vpop.f32.mrb[0].mxu0
        %1939 = vmatprep.mubr.f32.mxu0 0.0
        %1940 = vmatmul.mubr.f32.gmra.mrb[0].mxu0 %v1810
        %v1941 = vpop.f32.mrb[0].mxu0
        %v1942 = vadd.f32 %v1785, %v1941
        %v1943 = vpop.f32.mrb[0].mxu0
        %1944 = vmatprep.mubr.f32.mxu0 0.0
        %1945 = vmatmul.mubr.f32.gmra.mrb[0].mxu0 %v1813
        %v1946 = vpop.f32.mrb[0].mxu0
        %v1947 = vadd.f32 %v1785, %v1946
        %v1948 = vpop.f32.mrb[0].mxu0
        %1949 = vmatprep.mubr.f32.mxu0 0.0
        %1950 = vmatmul.mubr.f32.gmra.mrb[0].mxu0 %v1816
        %v1951 = vpop.f32.mrb[0].mxu0
        %v1952 = vadd.f32 %v1785, %v1951
        %v1953 = vpop.f32.mrb[0].mxu0
        %1954 = vmatprep.mubr.f32.mxu0 0.0
        %1955 = vmatmul.mubr.f32.gmra.mrb[0].mxu0 %v1819
        %v1956 = vpop.f32.mrb[0].mxu0
        %v1957 = vadd.f32 %v1785, %v1956
        %v1958 = vpop.f32.mrb[0].mxu0
        %1959 = vmatprep.mubr.f32.mxu0 0.0
        %1960 = vmatmul.mubr.f32.gmra.mrb[0].mxu0 %v1822
        %v1961 = vpop.f32.mrb[0].mxu0
        %v1962 = vadd.f32 %v1785, %v1961
        %v1963 = vpop.f32.mrb[0].mxu0
        %1964 = vmatprep.mubr.f32.mxu0 0.0
        %1965 = vmatmul.mubr.f32.gmra.mrb[0].mxu0 %v1825
        %v1966 = vpop.f32.mrb[0].mxu0
        %v1967 = vadd.f32 %v1785, %v1966
        %v1968 = vpop.f32.mrb[0].mxu0
        %1969 = vmatprep.mubr.f32.mxu0 0.0
        %1970 = vmatmul.mubr.f32.gmra.mrb[0].mxu0 %v1828
        %v1971 = vpop.f32.mrb[0].mxu0
        %v1972 = vadd.f32 %v1785, %v1971
        %v1973 = vpop.f32.mrb[0].mxu0
        %1974 = vmatprep.mubr.f32.mxu0 0.0
        %1975 = vmatmul.mubr.f32.gmra.mrb[0].mxu0 %v1831
        %v1976 = vpop.f32.mrb[0].mxu0
        %v1977 = vadd.f32 %v1785, %v1976
        %v1978 = vpop.f32.mrb[0].mxu0
        %1979 = vmatprep.mubr.f32.mxu0 0.0
        %1980 = vmatmul.mubr.f32.gmra.mrb[0].mxu0 %v1834
        %v1981 = vpop.f32.mrb[0].mxu0
        %v1982 = vadd.f32 %v1785, %v1981
        %v1983 = vpop.f32.mrb[0].mxu0
        %1984 = vdwg.mxu0
        %v1985 = vmax.f32 %v1907, 0.0
        %v1986 = vmax.f32 %v1912, 0.0
        %v1987 = vmax.f32 %v1917, 0.0
        %v1988 = vmax.f32 %v1922, 0.0
        %v1989 = vmax.f32 %v1927, 0.0
        %v1990 = vmax.f32 %v1932, 0.0
        %v1991 = vmax.f32 %v1937, 0.0
        %v1992 = vmax.f32 %v1942, 0.0
        %v1993 = vmax.f32 %v1947, 0.0
        %v1994 = vmax.f32 %v1952, 0.0
        %v1995 = vmax.f32 %v1957, 0.0
        %v1996 = vmax.f32 %v1962, 0.0
        %v1997 = vmax.f32 %v1967, 0.0
        %v1998 = vmax.f32 %v1972, 0.0
        %v1999 = vmax.f32 %v1977, 0.0
        %v2000 = vmax.f32 %v1982, 0.0
        %v2001 = vld [vmem:[%s5] sm:$0xf]
        %v2003 = vsel %vm814, %v1985, 0
        %v2006 = vsel %vm814, %v1986, 0
        %v2009 = vsel %vm814, %v1987, 0
        %v2012 = vsel %vm814, %v1988, 0
        %v2015 = vsel %vm814, %v1989, 0
        %v2018 = vsel %vm814, %v1990, 0
        %v2021 = vsel %vm814, %v1991, 0
        %v2024 = vsel %vm814, %v1992, 0
        %v2027 = vsel %vm814, %v1993, 0
        %v2030 = vsel %vm814, %v1994, 0
        %v2033 = vsel %vm814, %v1995, 0
        %v2036 = vsel %vm814, %v1996, 0
        %v2039 = vsel %vm814, %v1997, 0
        %v2042 = vsel %vm814, %v1998, 0
        %v2045 = vsel %vm814, %v1999, 0
        %v2048 = vsel %vm814, %v2000, 0
        %v2051 = vsel %vm1836, %v2001, 0
        %2053 = vmatprep.subr.mxu0 0.0
        %2054 = vmatpush1.msra.mxu0 %v2051
        %2055 = vmatprep.subr.mxu0 0.0
        %2056 = vmatpush1.msra.mxu0 0.0
        %2057 = vmatprep.subr.mxu0 0.0
        %2058 = vmatpush1.msra.mxu0 0.0
        %2059 = vmatprep.subr.mxu0 0.0
        %2060 = vmatpush1.msra.mxu0 0.0
        %2061 = vmatprep.subr.mxu0 0.0
        %2062 = vmatpush1.msra.mxu0 0.0
        %2063 = vmatprep.subr.mxu0 0.0
        %2064 = vmatpush1.msra.mxu0 0.0
        %2065 = vmatprep.subr.mxu0 0.0
        %2066 = vmatpush1.msra.mxu0 0.0
        %2067 = vmatprep.subr.mxu0 0.0
        %2068 = vmatpush1.msra.mxu0 0.0
        %2069 = vmatprep.subr.mxu0 0.0
        %2070 = vmatpush1.msra.mxu0 0.0
        %2071 = vmatprep.subr.mxu0 0.0
        %2072 = vmatpush1.msra.mxu0 0.0
        %2073 = vmatprep.subr.mxu0 0.0
        %2074 = vmatpush1.msra.mxu0 0.0
        %2075 = vmatprep.subr.mxu0 0.0
        %2076 = vmatpush1.msra.mxu0 0.0
        %2077 = vmatprep.subr.mxu0 0.0
        %2078 = vmatpush1.msra.mxu0 0.0
        %2079 = vmatprep.subr.mxu0 0.0
        %2080 = vmatpush1.msra.mxu0 0.0
        %2081 = vmatprep.subr.mxu0 0.0
        %2082 = vmatpush1.msra.mxu0 0.0
        %2083 = vmatprep.subr.mxu0 0.0
        %2084 = vmatpush1.msra.mxu0 0.0
        %2085 = vmatprep.subr.mxu0 0.0
        %2086 = vmatpush1.msra.mxu0 0.0
        %2087 = vmatprep.subr.mxu0 0.0
        %2088 = vmatpush1.msra.mxu0 0.0
        %2089 = vmatprep.subr.mxu0 0.0
        %2090 = vmatpush1.msra.mxu0 0.0
        %2091 = vmatprep.subr.mxu0 0.0
        %2092 = vmatpush1.msra.mxu0 0.0
        %2093 = vmatprep.subr.mxu0 0.0
        %2094 = vmatpush1.msra.mxu0 0.0
        %2095 = vmatprep.subr.mxu0 0.0
        %2096 = vmatpush1.msra.mxu0 0.0
        %2097 = vmatprep.subr.mxu0 0.0
        %2098 = vmatpush1.msra.mxu0 0.0
        %2099 = vmatprep.subr.mxu0 0.0
        %2100 = vmatpush1.msra.mxu0 0.0
        %2101 = vmatprep.subr.mxu0 0.0
        %2102 = vmatpush1.msra.mxu0 0.0
        %2103 = vmatprep.subr.mxu0 0.0
        %2104 = vmatpush1.msra.mxu0 0.0
        %2105 = vmatprep.subr.mxu0 0.0
        %2106 = vmatpush1.msra.mxu0 0.0
        %2107 = vmatprep.subr.mxu0 0.0
        %2108 = vmatpush1.msra.mxu0 0.0
        %2109 = vmatprep.subr.mxu0 0.0
        %2110 = vmatpush1.msra.mxu0 0.0
        %2111 = vmatprep.subr.mxu0 0.0
        %2112 = vmatpush1.msra.mxu0 0.0
        %2113 = vmatprep.subr.mxu0 0.0
        %2114 = vmatpush1.msra.mxu0 0.0
        %2115 = vmatprep.subr.mxu0 0.0
        %2116 = vmatpush1.msra.mxu0 0.0
        %2117 = vmatprep.mubr.f32.mxu0 0.0
        %2118 = vmatmul.mubr.f32.gmra.mrb[0].mxu0 %v2003
        %v2119 = vpop.f32.mrb[0].mxu0
        %v2120 = vadd.f32 0.0, %v2119
        %v2121 = vpop.f32.mrb[0].mxu0
        %2122 = vmatprep.mubr.f32.mxu0 0.0
        %2123 = vmatmul.mubr.f32.gmra.mrb[0].mxu0 %v2006
        %v2124 = vpop.f32.mrb[0].mxu0
        %v2125 = vadd.f32 0.0, %v2124
        %v2126 = vpop.f32.mrb[0].mxu0
        %2127 = vmatprep.mubr.f32.mxu0 0.0
        %2128 = vmatmul.mubr.f32.gmra.mrb[0].mxu0 %v2009
        %v2129 = vpop.f32.mrb[0].mxu0
        %v2130 = vadd.f32 0.0, %v2129
        %v2131 = vpop.f32.mrb[0].mxu0
        %2132 = vmatprep.mubr.f32.mxu0 0.0
        %2133 = vmatmul.mubr.f32.gmra.mrb[0].mxu0 %v2012
        %v2134 = vpop.f32.mrb[0].mxu0
        %v2135 = vadd.f32 0.0, %v2134
        %v2136 = vpop.f32.mrb[0].mxu0
        %2137 = vmatprep.mubr.f32.mxu0 0.0
        %2138 = vmatmul.mubr.f32.gmra.mrb[0].mxu0 %v2015
        %v2139 = vpop.f32.mrb[0].mxu0
        %v2140 = vadd.f32 0.0, %v2139
        %v2141 = vpop.f32.mrb[0].mxu0
        %2142 = vmatprep.mubr.f32.mxu0 0.0
        %2143 = vmatmul.mubr.f32.gmra.mrb[0].mxu0 %v2018
        %v2144 = vpop.f32.mrb[0].mxu0
        %v2145 = vadd.f32 0.0, %v2144
        %v2146 = vpop.f32.mrb[0].mxu0
        %2147 = vmatprep.mubr.f32.mxu0 0.0
        %2148 = vmatmul.mubr.f32.gmra.mrb[0].mxu0 %v2021
        %v2149 = vpop.f32.mrb[0].mxu0
        %v2150 = vadd.f32 0.0, %v2149
        %v2151 = vpop.f32.mrb[0].mxu0
        %2152 = vmatprep.mubr.f32.mxu0 0.0
        %2153 = vmatmul.mubr.f32.gmra.mrb[0].mxu0 %v2024
        %v2154 = vpop.f32.mrb[0].mxu0
        %v2155 = vadd.f32 0.0, %v2154
        %v2156 = vpop.f32.mrb[0].mxu0
        %2157 = vmatprep.mubr.f32.mxu0 0.0
        %2158 = vmatmul.mubr.f32.gmra.mrb[0].mxu0 %v2027
        %v2159 = vpop.f32.mrb[0].mxu0
        %v2160 = vadd.f32 0.0, %v2159
        %v2161 = vpop.f32.mrb[0].mxu0
        %2162 = vmatprep.mubr.f32.mxu0 0.0
        %2163 = vmatmul.mubr.f32.gmra.mrb[0].mxu0 %v2030
        %v2164 = vpop.f32.mrb[0].mxu0
        %v2165 = vadd.f32 0.0, %v2164
        %v2166 = vpop.f32.mrb[0].mxu0
        %2167 = vmatprep.mubr.f32.mxu0 0.0
        %2168 = vmatmul.mubr.f32.gmra.mrb[0].mxu0 %v2033
        %v2169 = vpop.f32.mrb[0].mxu0
        %v2170 = vadd.f32 0.0, %v2169
        %v2171 = vpop.f32.mrb[0].mxu0
        %2172 = vmatprep.mubr.f32.mxu0 0.0
        %2173 = vmatmul.mubr.f32.gmra.mrb[0].mxu0 %v2036
        %v2174 = vpop.f32.mrb[0].mxu0
        %v2175 = vadd.f32 0.0, %v2174
        %v2176 = vpop.f32.mrb[0].mxu0
        %2177 = vmatprep.mubr.f32.mxu0 0.0
        %2178 = vmatmul.mubr.f32.gmra.mrb[0].mxu0 %v2039
        %v2179 = vpop.f32.mrb[0].mxu0
        %v2180 = vadd.f32 0.0, %v2179
        %v2181 = vpop.f32.mrb[0].mxu0
        %2182 = vmatprep.mubr.f32.mxu0 0.0
        %2183 = vmatmul.mubr.f32.gmra.mrb[0].mxu0 %v2042
        %v2184 = vpop.f32.mrb[0].mxu0
        %v2185 = vadd.f32 0.0, %v2184
        %v2186 = vpop.f32.mrb[0].mxu0
        %2187 = vmatprep.mubr.f32.mxu0 0.0
        %2188 = vmatmul.mubr.f32.gmra.mrb[0].mxu0 %v2045
        %v2189 = vpop.f32.mrb[0].mxu0
        %v2190 = vadd.f32 0.0, %v2189
        %v2191 = vpop.f32.mrb[0].mxu0
        %2192 = vmatprep.mubr.f32.mxu0 0.0
        %2193 = vmatmul.mubr.f32.gmra.mrb[0].mxu0 %v2048
        %v2194 = vpop.f32.mrb[0].mxu0
        %v2195 = vadd.f32 0.0, %v2194
        %v2196 = vpop.f32.mrb[0].mxu0
        %2197 = vdwg.mxu0
        %v2198 = vadd.f32 %v2120, %v521
        %v2199 = vadd.f32 %v2125, %v522
        %v2200 = vadd.f32 %v2130, %v523
        %v2201 = vadd.f32 %v2135, %v524
        %v2202 = vadd.f32 %v2140, %v525
        %v2203 = vadd.f32 %v2145, %v526
        %v2204 = vadd.f32 %v2150, %v527
        %v2205 = vadd.f32 %v2155, %v528
        %v2206 = vadd.f32 %v2160, %v529
        %v2207 = vadd.f32 %v2165, %v530
        %v2208 = vadd.f32 %v2170, %v531
        %v2209 = vadd.f32 %v2175, %v532
        %v2210 = vadd.f32 %v2180, %v533
        %v2211 = vadd.f32 %v2185, %v534
        %v2212 = vadd.f32 %v2190, %v535
        %v2213 = vadd.f32 %v2195, %v536
        %2214 = vst.msk [vmem:[%s505] sm:$0xff] %vm603, %v2198
        %2215 = vst.msk [vmem:[%s505 + $0x8] sm:$0xff] %vm603, %v2199
        %2216 = vst.msk [vmem:[%s505 + $0x10] sm:$0xff] %vm603, %v2200
        %2217 = vst.msk [vmem:[%s505 + $0x18] sm:$0xff] %vm603, %v2201
        %2218 = vst.msk [vmem:[%s505 + $0x20] sm:$0xff] %vm603, %v2202
        %2219 = vst.msk [vmem:[%s505 + $0x28] sm:$0xff] %vm603, %v2203
        %2220 = vst.msk [vmem:[%s505 + $0x30] sm:$0xff] %vm603, %v2204
        %2221 = vst.msk [vmem:[%s505 + $0x38] sm:$0xff] %vm603, %v2205
        %2222 = vst.msk [vmem:[%s505 + $0x40] sm:$0xff] %vm603, %v2206
        %2223 = vst.msk [vmem:[%s505 + $0x48] sm:$0xff] %vm603, %v2207
        %2224 = vst.msk [vmem:[%s505 + $0x50] sm:$0xff] %vm603, %v2208
        %2225 = vst.msk [vmem:[%s505 + $0x58] sm:$0xff] %vm603, %v2209
        %2226 = vst.msk [vmem:[%s505 + $0x60] sm:$0xff] %vm603, %v2210
        %2227 = vst.msk [vmem:[%s505 + $0x68] sm:$0xff] %vm603, %v2211
        %2228 = vst.msk [vmem:[%s505 + $0x70] sm:$0xff] %vm603, %v2212
        %2229 = vst.msk [vmem:[%s505 + $0x78] sm:$0xff] %vm603, %v2213
        %s2230 = sand.u32 %s299, 1
        %s2231 = scalar_lea.sflag [#allocation5], %s2230
        %s2232 = sand.u32 %s299, 1
        %s2233 = smul.addr %s2232, 128
        %s2234 = scalar_lea.vmem [#allocation9], %s2233
        // Predicated region
        $region73: #{tpu_custom_call.1} parent=59 // pred_check
          %p2235 = pneg %p309
        $region74: #{tpu_custom_call.1} parent=59 // pred_check_branch
          %2237 = sbr.rel (%p2235) target = $region76
        $region75: #{tpu_custom_call.1} parent=59 // pred_region
          %s2238 = smul.u32 8, %s35
          %s2240 = ssub.s32 2048, 2048
          %2241 = vsyncadd %s2231, %s2240
          %s2242 = smul.addr %s2238, 2
          %s2243 = smul.addr %s34, 32
          %s2244 = sadd.s32 %s2242, %s2243
          %s2245 = smul.addr %s2244, 128
          %s2246 = scalar_lea.hbm %s10, %s2245
          %s2247 = sshll.u32 %s2234, 4
          %s2248 = int_to_ptr.vmem [resolvable:$true] %s2247
          %2253 = dma.vmem_to_hbm [thread:$0]  %s2248, 2048, %s2246, %s2231, 128, 128, 8
        $region76: #{tpu_custom_call.1} parent=59 // pred_fallthru
          _
      $region60: #{tpu_custom_call.1} parent=5 // pred_fallthru
        _
      %p2254 = scmp.le.s32.totalorder 2, %s25
      // Predicated region
      $region77: #{tpu_custom_call.1} parent=5 // pred_check
        %p2255 = pneg %p2254
      $region78: #{tpu_custom_call.1} parent=5 // pred_check_branch
        %2257 = sbr.rel (%p2255) target = $region80
      $region79: #{tpu_custom_call.1} parent=5 // pred_region
        %s2258 = ssub.s32 %s25, 2
        // Predicated region
        $region81: #{tpu_custom_call.1} parent=79 // pred_check
          %p2259 = pneg %p315
        $region82: #{tpu_custom_call.1} parent=79 // pred_check_branch
          %2261 = sbr.rel (%p2259) target = $region84
        $region83: #{tpu_custom_call.1} parent=79 // pred_region
          %s2262 = sand.u32 %s300, 1
          %s2263 = scalar_lea.sflag [#allocation5], %s2262
          %s2264 = sand.u32 %s300, 1
          %s2265 = smul.addr %s2264, 128
          %s2266 = scalar_lea.vmem [#allocation9], %s2265
          %2267 = dma.done %s2263, 2048
        $region84: #{tpu_custom_call.1} parent=79 // pred_fallthru
          _
      $region80: #{tpu_custom_call.1} parent=5 // pred_fallthru
        _
    $region6: #{tpu_custom_call.1} parent=1 // loop_footer
      %s29 = sadd.s32 1, %s25
    $region7: #{tpu_custom_call.1} parent=1 // loop_footer_branch
      %24 = sbr.rel target = $region3
    $region8: #{tpu_custom_call.1} parent=1 // loop_exit
      _
    %2268 = vsyncpa [#allocation4], 1
    %s2269 = scalar_lea.sflag [#allocation4], 1
    %2270 = vsyncpa %s2269, 1
    %2271 = vsyncpa [#allocation7], 1
    %s2272 = scalar_lea.sflag [#allocation7], 1
    %2273 = vsyncpa %s2272, 1
    %2274 = vsyncpa [#allocation5], 1
    %s2275 = scalar_lea.sflag [#allocation5], 1
    %2276 = vsyncpa %s2275, 1

</llo_original>
